<compile_context>
chip_gen: v5e
topology: v5e:2x2
jax: 0.10.0
libtpu: 0.0.40
codegen_flags: <defaults>
</compile_context>

<pallas_src>
import functools

import jax
import jax.numpy as jnp
from jax import lax
from jax.experimental import pallas as pl
from jax.experimental.pallas import tpu as pltpu


# ConvTranspose2d(kernel=4, stride=2, padding=4, dilation=3, output_padding=0),
# depthwise, phase-decomposed: output phase p (even/odd rows or cols) is built
# directly from the un-upsampled input with 2 kernel taps each:
#   out[2r + p] = sum_{(tap, d) in _TAPS[p]} w[tap] * in[r + d]
_TAPS = (((0, 2), (2, -1)),     # phase 0 (even): taps 0 (shift +2), 2 (shift -1)
         ((1, 1), (3, -2)))     # phase 1 (odd) : taps 1 (shift +1), 3 (shift -2)
_DJ = {0: 2, 1: 1, 2: -1, 3: -2}   # tap index -> input shift


# ---------------------------------------------------------------------------
# Fused Pallas kernel: full PyramidUpsampleModule forward for G images.
# ---------------------------------------------------------------------------
def _pyramid_kernel(x_ref, whead_ref, avg_ref, ahb_ref, kwb_ref, k4_ref,
                    k2_ref, wdec_ref, dwk_ref, bias_ref, o_ref,
                    *, H, W, C, G):
    """Ref contents (weights pre-folded in the wrapper, lane-dense layout):

      x_ref    (1, G*H, W*Cin)  : G images, (W, Cin) folded onto lanes
      whead_ref(W*Cin, 3*W*C)   : [kron(I_W, conv1*bn1_s) | kron(I_W, conv3*bn3_s)
                                   | kron(1_WxW, fc*bnF_s)]           (bf16)
      avg_ref  (G*H, G*H)       : kron(I_G, 1_HxH / (H*W))  (per-image GAP)
      ahb_ref  (2*G*H, G*H)     : stacked bilinear row matrices, both phases
      kwb_ref  (W*C, 2*W*C)     : bilinear col matrices, both phases   (bf16)
      k4_ref   (W*C, W*C)       : kron(I_W, conv4*bn5_s)               (bf16)
      k2_ref   (W*C, W*C)       : kron(I_W, conv2*bn2_s)               (bf16)
      wdec_ref (16, W*C)        : deconv tap rows  tile(w[ti,tj]*bnD_s)*colmask
      dwk_ref  (9, W*C)         : dw3x3 tap rows   tile(w[i,j]*bn4_s)*colmask
      bias_ref (6, W*C)         : [b1, b3, b4, b5, b2_eff, bF]
      o_ref    (1, 4, G*H, W*C) : output phases, phase index = 2*ph + pw
    """
    GH = G * H
    WC = W * C

    def mm(a, b):
        # bf16 x bf16 MXU passes, f32 accumulation (== default-precision f32).
        return jnp.dot(a.astype(jnp.bfloat16), b.astype(jnp.bfloat16),
                       preferred_element_type=jnp.float32)

    # ---- exact shift helpers: XLU rolls + zero masks (no MXU, no rounding) --
    row_id = lax.broadcasted_iota(jnp.int32, (GH, WC), 0)
    if G > 1:
        row_id = lax.rem(row_id, H)            # row index within each image
    row_masks = {d: jnp.logical_and(row_id + d >= 0, row_id + d < H)
                 for d in (-2, -1, 1, 2)}      # hoisted, reused by every shift

    def shift_rows(y, d):
        # result[r] = y[r + d] inside the image, 0 outside (zero padding).
        if d == 0:
            return y
        rolled = pltpu.roll(y, shift=(-d) % GH, axis=0)
        return jnp.where(row_masks[d], rolled, 0.0)

    def roll_cols(y, dj):
        # result[:, w*C + c] = y[:, (w+dj)*C + c]; wrapped (invalid) columns
        # are zeroed by the column mask folded into the per-tap weight rows.
        if dj == 0:
            return y
        return pltpu.roll(y, shift=(-dj * C) % WC, axis=1)

    # ---- packed head matmul: conv1 | conv3 | fc in one MXU op --------------
    head = mm(x_ref[0], whead_ref[...])                     # (GH, 3*WC)
    y1 = head[:, 0:WC] + bias_ref[0]                        # conv1 + BN1
    y2 = head[:, WC:2 * WC] + bias_ref[1]                   # conv3 + BN3
    # fc branch: per-image global average pool (+Linear+BN folded), already
    # broadcast over the image's rows -> no per-phase broadcast later.
    p3 = mm(avg_ref[...], head[:, 2 * WC:3 * WC]) + bias_ref[5]   # (GH, WC)

    # ---- up_pool2: depthwise 3x3 via rolls + per-channel weight rows -------
    rs = {di: shift_rows(y2, di) for di in (-1, 0, 1)}
    acc = None
    for i in range(3):
        for j in range(3):
            t = roll_cols(rs[i - 1], j - 1) * dwk_ref[i * 3 + j]
            acc = t if acc is None else acc + t
    y2 = jnp.maximum(acc + bias_ref[2], 0.0)                # BN4 + ReLU
    y2 = jnp.maximum(mm(y2, k4_ref[...]) + bias_ref[3], 0.0)  # conv4+BN5+ReLU

    # bilinear x2 (align_corners): both row phases in one matmul, then both
    # column phases in one (WC, 2*WC) matmul.
    tall = mm(ahb_ref[...], y2)                             # (2*GH, WC)
    pcols = mm(tall, kwb_ref[...])                          # (2*GH, 2*WC)

    # ---- up_pool1: transposed depthwise conv via rolls, phase-decomposed ---
    cs = {dj: roll_cols(y1, dj) for dj in (2, 1, -1, -2)}
    d_list = []
    for ph in range(2):
        for pw in range(2):
            d = None
            for ti, di in _TAPS[ph]:
                inner = None
                for tj, dj in _TAPS[pw]:
                    t = cs[dj] * wdec_ref[ti * 4 + tj]
                    inner = t if inner is None else inner + t
                term = shift_rows(inner, di)
                d = term if d is None else d + term
            d_list.append(d)                                # order: 2*ph + pw
    # deconv-BN bias folded into b2_eff; one M-packed conv2 for all 4 phases.
    dall = jnp.concatenate(d_list, axis=0)                  # (4*GH, WC)
    y1o = jnp.maximum(mm(dall, k2_ref[...]) + bias_ref[4], 0.0)

    # ---- fuse pool1 + pool2 + pool3, final ReLU, lane-dense stores ---------
    for ph in range(2):
        for pw in range(2):
            k = 2 * ph + pw
            o_ref[0, k] = jnp.maximum(
                y1o[k * GH:(k + 1) * GH]
                + pcols[ph * GH:(ph + 1) * GH, pw * WC:(pw + 1) * WC]
                + p3, 0.0)


# ---------------------------------------------------------------------------
# Weight folding helpers (plain JAX, run once per call under jit)
# ---------------------------------------------------------------------------
def _bilinear_matrix(in_size, out_size):
    """Interpolation matrix of nn.UpsamplingBilinear2d (align_corners=True)."""
    o = jnp.arange(out_size, dtype=jnp.float32)
    src = o * (in_size - 1) / max(out_size - 1, 1)
    i0 = jnp.floor(src).astype(jnp.int32)
    i1 = jnp.minimum(i0 + 1, in_size - 1)
    frac = src - i0.astype(jnp.float32)
    A = jnp.zeros((out_size, in_size), jnp.float32)
    A = A.at[jnp.arange(out_size), i0].add(1.0 - frac)
    A = A.at[jnp.arange(out_size), i1].add(frac)
    return A


def _pack_params(params, H, W, G):
    """Fold conv/BN weights into the lane-dense blocks the kernel consumes."""
    Cin, C = params["conv1_w"].shape
    f32 = jnp.float32
    eyeW = jnp.eye(W, dtype=f32)
    eyeC = jnp.eye(C, dtype=f32)
    eyeG = jnp.eye(G, dtype=f32)

    def fold1x1(w, s):              # BN scale folded into the conv columns
        return jnp.kron(eyeW, w * s[None, :])

    k1 = fold1x1(params["conv1_w"], params["bn1_s"])
    k3 = fold1x1(params["conv3_w"], params["bn3_s"])
    kfc = jnp.kron(jnp.ones((W, W), f32),
                   params["fc_w"] * params["bnF_s"][None, :])
    whead = jnp.concatenate([k1, k3, kfc], axis=1).astype(jnp.bfloat16)

    avg = jnp.kron(eyeG, jnp.full((H, H), 1.0 / (H * W), f32))       # (GH, GH)

    AH = _bilinear_matrix(H, 2 * H)
    AW = _bilinear_matrix(W, 2 * W)
    ahb = jnp.concatenate([jnp.kron(eyeG, AH[0::2]),
                           jnp.kron(eyeG, AH[1::2])], axis=0)        # (2GH, GH)
    kwb = jnp.concatenate([jnp.kron(AW[0::2].T, eyeC),
                           jnp.kron(AW[1::2].T, eyeC)],
                          axis=1).astype(jnp.bfloat16)               # (WC, 2WC)

    k4 = fold1x1(params["conv4_w"], params["bn5_s"]).astype(jnp.bfloat16)
    k2_f32 = fold1x1(params["conv2_w"], params["bn2_s"])
    k2 = k2_f32.astype(jnp.bfloat16)

    def tile(v):
        return jnp.tile(v, W)                                # (C,) -> (W*C,)

    def colmask(dj):                 # zero the columns the lane roll wrapped
        ok = (jnp.arange(W) + dj >= 0) & (jnp.arange(W) + dj < W)
        return jnp.repeat(ok.astype(f32), C)

    wdec = jnp.stack([tile(params["deconv_w"][ti, tj] * params["bnD_s"])
                      * colmask(_DJ[tj])
                      for ti in range(4) for tj in range(4)])        # (16, WC)
    dwk = jnp.stack([tile(params["dw3_w"][i, j] * params["bn4_s"])
                     * colmask(j - 1)
                     for i in range(3) for j in range(3)])           # (9, WC)

    # deconv BN bias is constant over space -> fold it through the linear conv2
    b2_eff = tile(params["bn2_b"]) + tile(params["bnD_b"]) @ k2_f32
    bias = jnp.stack([tile(params["bn1_b"]), tile(params["bn3_b"]),
                      tile(params["bn4_b"]), tile(params["bn5_b"]),
                      b2_eff, tile(params["bnF_b"])])                # (6, WC)
    return whead, avg, ahb, kwb, k4, k2, wdec, dwk, bias


# ---------------------------------------------------------------------------
# Top-level wrapper: NCHW -> NCHW, one fused pallas_call
# ---------------------------------------------------------------------------
def pyramid_upsample(x_nchw, params):
    B, Cin, H, W = x_nchw.shape
    C = params["conv1_w"].shape[1]
    WC = W * C

    # 2-way "parallel" split keeps both v7x TensorCores busy; the rest of the
    # batch is folded into the matmul M dimension (one weight residency,
    # bigger MXU row fill / fewer steps on single-core v5e / v6e).
    NG = 2 if (B >= 2 and B % 2 == 0) else 1
    G = B // NG
    GH = G * H

    whead, avg, ahb, kwb, k4, k2, wdec, dwk, bias = _pack_params(params, H, W, G)

    # channels-last, fold (W, Cin) onto the lane dim, fold G images onto rows
    x_fold = jnp.transpose(x_nchw, (0, 2, 3, 1)).astype(jnp.float32)
    x_fold = x_fold.reshape(NG, GH, W * Cin)

    def rep(a):                     # whole-array operand, same block every step
        nd = a.ndim
        return pl.BlockSpec(a.shape, lambda i: (0,) * nd)

    out = pl.pallas_call(
        functools.partial(_pyramid_kernel, H=H, W=W, C=C, G=G),
        out_shape=jax.ShapeDtypeStruct((NG, 4, GH, WC), jnp.float32),
        grid=(NG,),
        in_specs=[pl.BlockSpec((1, GH, W * Cin), lambda i: (i, 0, 0)),
                  rep(whead), rep(avg), rep(ahb), rep(kwb),
                  rep(k4), rep(k2), rep(wdec), rep(dwk), rep(bias)],
        out_specs=pl.BlockSpec((1, 4, GH, WC), lambda i: (i, 0, 0, 0)),
        compiler_params=pltpu.CompilerParams(
            dimension_semantics=("parallel",),
            vmem_limit_bytes=32 * 1024 * 1024),
    )(x_fold, whead, avg, ahb, kwb, k4, k2, wdec, dwk, bias)

    # un-interleave the 4 output phases -> NCHW
    # TODO(synk): if the consumer accepts NHWC / the 4-phase layout, drop this
    # epilogue transpose (it re-reads/re-writes the whole output once).
    o = out.reshape(NG, 2, 2, G, H, W, C)              # (ng, ph, pw, g, h, w, c)
    o = jnp.transpose(o, (0, 3, 6, 4, 1, 5, 2))        # (ng, g, c, h, ph, w, pw)
    return o.reshape(B, C, 2 * H, 2 * W)


# ---------------------------------------------------------------------------
# Pure-JAX (XLA) reference of the PyTorch module (inference-mode BN)
# ---------------------------------------------------------------------------
def reference_forward(x_nchw, params):
    hp = lax.Precision.HIGHEST
    B, Cin, H, W = x_nchw.shape
    C = params["conv1_w"].shape[1]
    x = jnp.transpose(x_nchw, (0, 2, 3, 1)).astype(jnp.float32)   # NHWC

    def pw(v, w, s, b, relu):
        y = jnp.einsum("bhwi,io->bhwo", v, w, precision=hp) * s + b
        return jnp.maximum(y, 0.0) if relu else y

    def dwconv(v, k, lhs_dil, pad, rhs_dil):
        return lax.conv_general_dilated(
            v, k[:, :, None, :], window_strides=(1, 1),
            padding=(pad, pad), lhs_dilation=lhs_dil, rhs_dilation=rhs_dil,
            dimension_numbers=("NHWC", "HWIO", "NHWC"),
            feature_group_count=C, precision=hp)

    # up_pool1: 1x1(+BN) -> ConvTranspose2d(k4,s2,p4,d3, depthwise)+BN -> 1x1+BN+ReLU
    y1 = pw(x, params["conv1_w"], params["bn1_s"], params["bn1_b"], False)
    wf = params["deconv_w"][::-1, ::-1, :]    # flip: transposed conv == correlation
    y1 = dwconv(y1, wf, (2, 2), (5, 5), (3, 3))
    y1 = y1 * params["bnD_s"] + params["bnD_b"]
    y1 = pw(y1, params["conv2_w"], params["bn2_s"], params["bn2_b"], True)

    # up_pool2: 1x1(+BN) -> dw3x3+BN+ReLU -> 1x1+BN+ReLU -> bilinear x2 (align_corners)
    y2 = pw(x, params["conv3_w"], params["bn3_s"], params["bn3_b"], False)
    y2 = dwconv(y2, params["dw3_w"], (1, 1), (1, 1), (1, 1))
    y2 = jnp.maximum(y2 * params["bn4_s"] + params["bn4_b"], 0.0)
    y2 = pw(y2, params["conv4_w"], params["bn5_s"], params["bn5_b"], True)
    AH = _bilinear_matrix(H, 2 * H)
    AW = _bilinear_matrix(W, 2 * W)
    y2 = jnp.einsum("ph,bhwc->bpwc", AH, y2, precision=hp)
    y2 = jnp.einsum("qw,bpwc->bpqc", AW, y2, precision=hp)

    # fc branch: GAP + Linear + BN1d
    p3 = jnp.einsum("bi,io->bo", jnp.mean(x, axis=(1, 2)), params["fc_w"],
                    precision=hp)
    p3 = p3 * params["bnF_s"] + params["bnF_b"]

    out = jnp.maximum(y1 + y2 + p3[:, None, None, :], 0.0)
    return jnp.transpose(out, (0, 3, 1, 2))


# ---------------------------------------------------------------------------
# Deterministic synthetic parameters (BN folded to inference scale/bias)
# ---------------------------------------------------------------------------
def init_params(key, cin, cout):
    keys = jax.random.split(key, 14)

    def bn(k, c):
        k1, k2, k3, k4 = jax.random.split(k, 4)
        gamma = jax.random.uniform(k1, (c,), jnp.float32, 0.5, 1.5)
        beta = 0.1 * jax.random.normal(k2, (c,), jnp.float32)
        mean = 0.1 * jax.random.normal(k3, (c,), jnp.float32)
        var = jax.random.uniform(k4, (c,), jnp.float32, 0.5, 1.5)
        scale = gamma * lax.rsqrt(var + 1e-5)
        return scale, beta - mean * scale

    p = {}
    p["conv1_w"] = 0.3 * jax.random.normal(keys[0], (cin, cout), jnp.float32)
    p["bn1_s"], p["bn1_b"] = bn(keys[1], cout)
    p["deconv_w"] = 0.3 * jax.random.normal(keys[2], (4, 4, cout), jnp.float32)
    p["bnD_s"], p["bnD_b"] = bn(keys[3], cout)
    p["conv2_w"] = 0.3 * jax.random.normal(keys[4], (cout, cout), jnp.float32)
    p["bn2_s"], p["bn2_b"] = bn(keys[5], cout)
    p["conv3_w"] = 0.3 * jax.random.normal(keys[6], (cin, cout), jnp.float32)
    p["bn3_s"], p["bn3_b"] = bn(keys[7], cout)
    p["dw3_w"] = 0.3 * jax.random.normal(keys[8], (3, 3, cout), jnp.float32)
    p["bn4_s"], p["bn4_b"] = bn(keys[9], cout)
    p["conv4_w"] = 0.3 * jax.random.normal(keys[10], (cout, cout), jnp.float32)
    p["bn5_s"], p["bn5_b"] = bn(keys[11], cout)
    p["fc_w"] = 0.3 * jax.random.normal(keys[12], (cin, cout), jnp.float32)
    p["bnF_s"], p["bnF_b"] = bn(keys[13], cout)
    return p


if __name__ == "__main__":
    key = jax.random.PRNGKey(0)
    kx, kparam = jax.random.split(key)
    B, Cin, H, W = 2, 4, 16, 16
    Cout = 8                                 # W * Cout = 128 -> lane-dense tiles
    x = jax.random.normal(kx, (B, Cin, H, W), jnp.float32)
    params = init_params(kparam, Cin, Cout)

    out = jax.block_until_ready(jax.jit(pyramid_upsample)(x, params))
    assert out.shape == (B, Cout, 2 * H, 2 * W), out.shape
    assert bool(jnp.all(jnp.isfinite(out)))

    ref = jax.block_until_ready(jax.jit(reference_forward)(x, params))
    # Matmuls run as bf16 MXU passes with f32 accumulation -> loose tolerance.
    max_err = float(jnp.max(jnp.abs(out - ref)))
    assert max_err < 5e-2, f"mismatch vs reference: max abs err = {max_err}"
    print("KERNEL_OK")
</pallas_src>

<mosaic_0001>
module attributes {stable_mosaic.version = 11 : i64} {
  func.func @_pyramid_kernel(%arg0: i32, %arg1: memref<1x16x64xf32, #tpu.memory_space<vmem>>, %arg2: memref<64x384xbf16, #tpu.memory_space<vmem>>, %arg3: memref<16x16xf32, #tpu.memory_space<vmem>>, %arg4: memref<32x16xf32, #tpu.memory_space<vmem>>, %arg5: memref<128x256xbf16, #tpu.memory_space<vmem>>, %arg6: memref<128x128xbf16, #tpu.memory_space<vmem>>, %arg7: memref<128x128xbf16, #tpu.memory_space<vmem>>, %arg8: memref<16x128xf32, #tpu.memory_space<vmem>>, %arg9: memref<9x128xf32, #tpu.memory_space<vmem>>, %arg10: memref<6x128xf32, #tpu.memory_space<vmem>>, %arg11: memref<1x4x16x128xf32, #tpu.memory_space<vmem>>) attributes {dimension_semantics = [#tpu.dimension_semantics<parallel>], iteration_bounds = array<i64: 2>, scalar_prefetch = 0 : i64, scratch_operands = 0 : i64, tpu.core_type = #tpu.core_type<tc>, window_params = [{transform_indices = @transform_0, window_bounds = array<i64: 1, 16, 64>}, {pipeline_mode = #tpu.pipeline_mode<synchronous>, transform_indices = @transform_1, window_bounds = array<i64: 64, 384>}, {pipeline_mode = #tpu.pipeline_mode<synchronous>, transform_indices = @transform_2, window_bounds = array<i64: 16, 16>}, {pipeline_mode = #tpu.pipeline_mode<synchronous>, transform_indices = @transform_3, window_bounds = array<i64: 32, 16>}, {pipeline_mode = #tpu.pipeline_mode<synchronous>, transform_indices = @transform_4, window_bounds = array<i64: 128, 256>}, {pipeline_mode = #tpu.pipeline_mode<synchronous>, transform_indices = @transform_5, window_bounds = array<i64: 128, 128>}, {pipeline_mode = #tpu.pipeline_mode<synchronous>, transform_indices = @transform_6, window_bounds = array<i64: 128, 128>}, {pipeline_mode = #tpu.pipeline_mode<synchronous>, transform_indices = @transform_7, window_bounds = array<i64: 16, 128>}, {pipeline_mode = #tpu.pipeline_mode<synchronous>, transform_indices = @transform_8, window_bounds = array<i64: 9, 128>}, {pipeline_mode = #tpu.pipeline_mode<synchronous>, transform_indices = @transform_9, window_bounds = array<i64: 6, 128>}, {transform_indices = @transform_10, window_bounds = array<i64: 1, 4, 16, 128>}]} {
    %0 = tpu.iota {dimensions = array<i32: 0>} : vector<16x128xi32>
    %c-2_i32 = arith.constant -2 : i32
    %1 = vector.broadcast %c-2_i32 : i32 to vector<16x128xi32>
    %2 = arith.addi %0, %1 : vector<16x128xi32>
    %c0_i32 = arith.constant 0 : i32
    %3 = vector.broadcast %c0_i32 : i32 to vector<16x128xi32>
    %4 = arith.cmpi sge, %2, %3 : vector<16x128xi32>
    %c-2_i32_0 = arith.constant -2 : i32
    %5 = vector.broadcast %c-2_i32_0 : i32 to vector<16x128xi32>
    %6 = arith.addi %0, %5 : vector<16x128xi32>
    %c16_i32 = arith.constant 16 : i32
    %7 = vector.broadcast %c16_i32 : i32 to vector<16x128xi32>
    %8 = arith.cmpi slt, %6, %7 : vector<16x128xi32>
    %9 = arith.andi %4, %8 : vector<16x128xi1>
    %c-1_i32 = arith.constant -1 : i32
    %10 = vector.broadcast %c-1_i32 : i32 to vector<16x128xi32>
    %11 = arith.addi %0, %10 : vector<16x128xi32>
    %c0_i32_1 = arith.constant 0 : i32
    %12 = vector.broadcast %c0_i32_1 : i32 to vector<16x128xi32>
    %13 = arith.cmpi sge, %11, %12 : vector<16x128xi32>
    %c-1_i32_2 = arith.constant -1 : i32
    %14 = vector.broadcast %c-1_i32_2 : i32 to vector<16x128xi32>
    %15 = arith.addi %0, %14 : vector<16x128xi32>
    %c16_i32_3 = arith.constant 16 : i32
    %16 = vector.broadcast %c16_i32_3 : i32 to vector<16x128xi32>
    %17 = arith.cmpi slt, %15, %16 : vector<16x128xi32>
    %18 = arith.andi %13, %17 : vector<16x128xi1>
    %c1_i32 = arith.constant 1 : i32
    %19 = vector.broadcast %c1_i32 : i32 to vector<16x128xi32>
    %20 = arith.addi %0, %19 : vector<16x128xi32>
    %c0_i32_4 = arith.constant 0 : i32
    %21 = vector.broadcast %c0_i32_4 : i32 to vector<16x128xi32>
    %22 = arith.cmpi sge, %20, %21 : vector<16x128xi32>
    %c1_i32_5 = arith.constant 1 : i32
    %23 = vector.broadcast %c1_i32_5 : i32 to vector<16x128xi32>
    %24 = arith.addi %0, %23 : vector<16x128xi32>
    %c16_i32_6 = arith.constant 16 : i32
    %25 = vector.broadcast %c16_i32_6 : i32 to vector<16x128xi32>
    %26 = arith.cmpi slt, %24, %25 : vector<16x128xi32>
    %27 = arith.andi %22, %26 : vector<16x128xi1>
    %c2_i32 = arith.constant 2 : i32
    %28 = vector.broadcast %c2_i32 : i32 to vector<16x128xi32>
    %29 = arith.addi %0, %28 : vector<16x128xi32>
    %c0_i32_7 = arith.constant 0 : i32
    %30 = vector.broadcast %c0_i32_7 : i32 to vector<16x128xi32>
    %31 = arith.cmpi sge, %29, %30 : vector<16x128xi32>
    %c2_i32_8 = arith.constant 2 : i32
    %32 = vector.broadcast %c2_i32_8 : i32 to vector<16x128xi32>
    %33 = arith.addi %0, %32 : vector<16x128xi32>
    %c16_i32_9 = arith.constant 16 : i32
    %34 = vector.broadcast %c16_i32_9 : i32 to vector<16x128xi32>
    %35 = arith.cmpi slt, %33, %34 : vector<16x128xi32>
    %36 = arith.andi %31, %35 : vector<16x128xi1>
    %c0 = arith.constant 0 : index
    %c0_10 = arith.constant 0 : index
    %c0_11 = arith.constant 0 : index
    %37 = vector.load %arg1[%c0, %c0_10, %c0_11] : memref<1x16x64xf32, #tpu.memory_space<vmem>>, vector<1x16x64xf32>
    %38 = vector.shape_cast %37 : vector<1x16x64xf32> to vector<16x64xf32>
    %c0_12 = arith.constant 0 : index
    %c0_13 = arith.constant 0 : index
    %39 = vector.load %arg2[%c0_12, %c0_13] : memref<64x384xbf16, #tpu.memory_space<vmem>>, vector<64x384xbf16>
    %40 = arith.truncf %38 : vector<16x64xf32> to vector<16x64xbf16>
    %cst = arith.constant dense<0.000000e+00> : vector<16x384xf32>
    %41 = tpu.matmul %40, %39, %cst {dimension_numbers = #tpu.dot_dimension_numbers<[1], [0], [0], [1], [0, 0, 1, 1], [], []>} : vector<16x64xbf16>, vector<64x384xbf16>, vector<16x384xf32> -> vector<16x384xf32>
    %42 = vector.extract_strided_slice %41 {offsets = [0, 0], sizes = [16, 128], strides = [1, 1]} : vector<16x384xf32> to vector<16x128xf32>
    %c0_14 = arith.constant 0 : index
    %c0_15 = arith.constant 0 : index
    %43 = vector.load %arg10[%c0_14, %c0_15] : memref<6x128xf32, #tpu.memory_space<vmem>>, vector<1x128xf32>
    %44 = vector.shape_cast %43 : vector<1x128xf32> to vector<128xf32>
    %45 = vector.shape_cast %44 : vector<128xf32> to vector<1x128xf32>
    %46 = vector.broadcast %45 : vector<1x128xf32> to vector<16x128xf32>
    %47 = arith.addf %42, %46 : vector<16x128xf32>
    %48 = vector.extract_strided_slice %41 {offsets = [0, 128], sizes = [16, 128], strides = [1, 1]} : vector<16x384xf32> to vector<16x128xf32>
    %c1 = arith.constant 1 : index
    %c0_16 = arith.constant 0 : index
    %49 = vector.load %arg10[%c1, %c0_16] : memref<6x128xf32, #tpu.memory_space<vmem>>, vector<1x128xf32>
    %50 = vector.shape_cast %49 : vector<1x128xf32> to vector<128xf32>
    %51 = vector.shape_cast %50 : vector<128xf32> to vector<1x128xf32>
    %52 = vector.broadcast %51 : vector<1x128xf32> to vector<16x128xf32>
    %53 = arith.addf %48, %52 : vector<16x128xf32>
    %c0_17 = arith.constant 0 : index
    %c0_18 = arith.constant 0 : index
    %54 = vector.load %arg3[%c0_17, %c0_18] : memref<16x16xf32, #tpu.memory_space<vmem>>, vector<16x16xf32>
    %55 = vector.extract_strided_slice %41 {offsets = [0, 256], sizes = [16, 128], strides = [1, 1]} : vector<16x384xf32> to vector<16x128xf32>
    %56 = arith.truncf %54 : vector<16x16xf32> to vector<16x16xbf16>
    %57 = arith.truncf %55 : vector<16x128xf32> to vector<16x128xbf16>
    %cst_19 = arith.constant dense<0.000000e+00> : vector<16x128xf32>
    %58 = tpu.matmul %56, %57, %cst_19 {dimension_numbers = #tpu.dot_dimension_numbers<[1], [0], [0], [1], [0, 0, 1, 1], [], []>} : vector<16x16xbf16>, vector<16x128xbf16>, vector<16x128xf32> -> vector<16x128xf32>
    %c5 = arith.constant 5 : index
    %c0_20 = arith.constant 0 : index
    %59 = vector.load %arg10[%c5, %c0_20] : memref<6x128xf32, #tpu.memory_space<vmem>>, vector<1x128xf32>
    %60 = vector.shape_cast %59 : vector<1x128xf32> to vector<128xf32>
    %61 = vector.shape_cast %60 : vector<128xf32> to vector<1x128xf32>
    %62 = vector.broadcast %61 : vector<1x128xf32> to vector<16x128xf32>
    %63 = arith.addf %58, %62 : vector<16x128xf32>
    %c1_i32_21 = arith.constant 1 : i32
    %64 = tpu.dynamic_rotate %53 by %c1_i32_21 dim 0 : vector<16x128xf32>, i32 -> vector<16x128xf32>
    %cst_22 = arith.constant 0.000000e+00 : f32
    %65 = vector.broadcast %cst_22 : f32 to vector<16x128xf32>
    %66 = arith.select %18, %64, %65 : vector<16x128xi1>, vector<16x128xf32>
    %c15_i32 = arith.constant 15 : i32
    %67 = tpu.dynamic_rotate %53 by %c15_i32 dim 0 : vector<16x128xf32>, i32 -> vector<16x128xf32>
    %cst_23 = arith.constant 0.000000e+00 : f32
    %68 = vector.broadcast %cst_23 : f32 to vector<16x128xf32>
    %69 = arith.select %27, %67, %68 : vector<16x128xi1>, vector<16x128xf32>
    %c8_i32 = arith.constant 8 : i32
    %70 = tpu.dynamic_rotate %66 by %c8_i32 dim 1 : vector<16x128xf32>, i32 -> vector<16x128xf32>
    %c0_24 = arith.constant 0 : index
    %c0_25 = arith.constant 0 : index
    %71 = vector.load %arg9[%c0_24, %c0_25] : memref<9x128xf32, #tpu.memory_space<vmem>>, vector<1x128xf32>
    %72 = vector.shape_cast %71 : vector<1x128xf32> to vector<128xf32>
    %73 = vector.shape_cast %72 : vector<128xf32> to vector<1x128xf32>
    %74 = vector.broadcast %73 : vector<1x128xf32> to vector<16x128xf32>
    %75 = arith.mulf %70, %74 : vector<16x128xf32>
    %c1_26 = arith.constant 1 : index
    %c0_27 = arith.constant 0 : index
    %76 = vector.load %arg9[%c1_26, %c0_27] : memref<9x128xf32, #tpu.memory_space<vmem>>, vector<1x128xf32>
    %77 = vector.shape_cast %76 : vector<1x128xf32> to vector<128xf32>
    %78 = vector.shape_cast %77 : vector<128xf32> to vector<1x128xf32>
    %79 = vector.broadcast %78 : vector<1x128xf32> to vector<16x128xf32>
    %80 = arith.mulf %66, %79 : vector<16x128xf32>
    %81 = arith.addf %75, %80 : vector<16x128xf32>
    %c120_i32 = arith.constant 120 : i32
    %82 = tpu.dynamic_rotate %66 by %c120_i32 dim 1 : vector<16x128xf32>, i32 -> vector<16x128xf32>
    %c2 = arith.constant 2 : index
    %c0_28 = arith.constant 0 : index
    %83 = vector.load %arg9[%c2, %c0_28] : memref<9x128xf32, #tpu.memory_space<vmem>>, vector<1x128xf32>
    %84 = vector.shape_cast %83 : vector<1x128xf32> to vector<128xf32>
    %85 = vector.shape_cast %84 : vector<128xf32> to vector<1x128xf32>
    %86 = vector.broadcast %85 : vector<1x128xf32> to vector<16x128xf32>
    %87 = arith.mulf %82, %86 : vector<16x128xf32>
    %88 = arith.addf %81, %87 : vector<16x128xf32>
    %c8_i32_29 = arith.constant 8 : i32
    %89 = tpu.dynamic_rotate %53 by %c8_i32_29 dim 1 : vector<16x128xf32>, i32 -> vector<16x128xf32>
    %c3 = arith.constant 3 : index
    %c0_30 = arith.constant 0 : index
    %90 = vector.load %arg9[%c3, %c0_30] : memref<9x128xf32, #tpu.memory_space<vmem>>, vector<1x128xf32>
    %91 = vector.shape_cast %90 : vector<1x128xf32> to vector<128xf32>
    %92 = vector.shape_cast %91 : vector<128xf32> to vector<1x128xf32>
    %93 = vector.broadcast %92 : vector<1x128xf32> to vector<16x128xf32>
    %94 = arith.mulf %89, %93 : vector<16x128xf32>
    %95 = arith.addf %88, %94 : vector<16x128xf32>
    %c4 = arith.constant 4 : index
    %c0_31 = arith.constant 0 : index
    %96 = vector.load %arg9[%c4, %c0_31] : memref<9x128xf32, #tpu.memory_space<vmem>>, vector<1x128xf32>
    %97 = vector.shape_cast %96 : vector<1x128xf32> to vector<128xf32>
    %98 = vector.shape_cast %97 : vector<128xf32> to vector<1x128xf32>
    %99 = vector.broadcast %98 : vector<1x128xf32> to vector<16x128xf32>
    %100 = arith.mulf %53, %99 : vector<16x128xf32>
    %101 = arith.addf %95, %100 : vector<16x128xf32>
    %c120_i32_32 = arith.constant 120 : i32
    %102 = tpu.dynamic_rotate %53 by %c120_i32_32 dim 1 : vector<16x128xf32>, i32 -> vector<16x128xf32>
    %c5_33 = arith.constant 5 : index
    %c0_34 = arith.constant 0 : index
    %103 = vector.load %arg9[%c5_33, %c0_34] : memref<9x128xf32, #tpu.memory_space<vmem>>, vector<1x128xf32>
    %104 = vector.shape_cast %103 : vector<1x128xf32> to vector<128xf32>
    %105 = vector.shape_cast %104 : vector<128xf32> to vector<1x128xf32>
    %106 = vector.broadcast %105 : vector<1x128xf32> to vector<16x128xf32>
    %107 = arith.mulf %102, %106 : vector<16x128xf32>
    %108 = arith.addf %101, %107 : vector<16x128xf32>
    %c8_i32_35 = arith.constant 8 : i32
    %109 = tpu.dynamic_rotate %69 by %c8_i32_35 dim 1 : vector<16x128xf32>, i32 -> vector<16x128xf32>
    %c6 = arith.constant 6 : index
    %c0_36 = arith.constant 0 : index
    %110 = vector.load %arg9[%c6, %c0_36] : memref<9x128xf32, #tpu.memory_space<vmem>>, vector<1x128xf32>
    %111 = vector.shape_cast %110 : vector<1x128xf32> to vector<128xf32>
    %112 = vector.shape_cast %111 : vector<128xf32> to vector<1x128xf32>
    %113 = vector.broadcast %112 : vector<1x128xf32> to vector<16x128xf32>
    %114 = arith.mulf %109, %113 : vector<16x128xf32>
    %115 = arith.addf %108, %114 : vector<16x128xf32>
    %c7 = arith.constant 7 : index
    %c0_37 = arith.constant 0 : index
    %116 = vector.load %arg9[%c7, %c0_37] : memref<9x128xf32, #tpu.memory_space<vmem>>, vector<1x128xf32>
    %117 = vector.shape_cast %116 : vector<1x128xf32> to vector<128xf32>
    %118 = vector.shape_cast %117 : vector<128xf32> to vector<1x128xf32>
    %119 = vector.broadcast %118 : vector<1x128xf32> to vector<16x128xf32>
    %120 = arith.mulf %69, %119 : vector<16x128xf32>
    %121 = arith.addf %115, %120 : vector<16x128xf32>
    %c120_i32_38 = arith.constant 120 : i32
    %122 = tpu.dynamic_rotate %69 by %c120_i32_38 dim 1 : vector<16x128xf32>, i32 -> vector<16x128xf32>
    %c8 = arith.constant 8 : index
    %c0_39 = arith.constant 0 : index
    %123 = vector.load %arg9[%c8, %c0_39] : memref<9x128xf32, #tpu.memory_space<vmem>>, vector<1x128xf32>
    %124 = vector.shape_cast %123 : vector<1x128xf32> to vector<128xf32>
    %125 = vector.shape_cast %124 : vector<128xf32> to vector<1x128xf32>
    %126 = vector.broadcast %125 : vector<1x128xf32> to vector<16x128xf32>
    %127 = arith.mulf %122, %126 : vector<16x128xf32>
    %128 = arith.addf %121, %127 : vector<16x128xf32>
    %c2_40 = arith.constant 2 : index
    %c0_41 = arith.constant 0 : index
    %129 = vector.load %arg10[%c2_40, %c0_41] : memref<6x128xf32, #tpu.memory_space<vmem>>, vector<1x128xf32>
    %130 = vector.shape_cast %129 : vector<1x128xf32> to vector<128xf32>
    %131 = vector.shape_cast %130 : vector<128xf32> to vector<1x128xf32>
    %132 = vector.broadcast %131 : vector<1x128xf32> to vector<16x128xf32>
    %133 = arith.addf %128, %132 : vector<16x128xf32>
    %cst_42 = arith.constant 0.000000e+00 : f32
    %134 = vector.broadcast %cst_42 : f32 to vector<16x128xf32>
    %135 = arith.maximumf %133, %134 : vector<16x128xf32>
    %c0_43 = arith.constant 0 : index
    %c0_44 = arith.constant 0 : index
    %136 = vector.load %arg6[%c0_43, %c0_44] : memref<128x128xbf16, #tpu.memory_space<vmem>>, vector<128x128xbf16>
    %137 = arith.truncf %135 : vector<16x128xf32> to vector<16x128xbf16>
    %cst_45 = arith.constant dense<0.000000e+00> : vector<16x128xf32>
    %138 = tpu.matmul %137, %136, %cst_45 {dimension_numbers = #tpu.dot_dimension_numbers<[1], [0], [0], [1], [0, 0, 1, 1], [], []>} : vector<16x128xbf16>, vector<128x128xbf16>, vector<16x128xf32> -> vector<16x128xf32>
    %c3_46 = arith.constant 3 : index
    %c0_47 = arith.constant 0 : index
    %139 = vector.load %arg10[%c3_46, %c0_47] : memref<6x128xf32, #tpu.memory_space<vmem>>, vector<1x128xf32>
    %140 = vector.shape_cast %139 : vector<1x128xf32> to vector<128xf32>
    %141 = vector.shape_cast %140 : vector<128xf32> to vector<1x128xf32>
    %142 = vector.broadcast %141 : vector<1x128xf32> to vector<16x128xf32>
    %143 = arith.addf %138, %142 : vector<16x128xf32>
    %cst_48 = arith.constant 0.000000e+00 : f32
    %144 = vector.broadcast %cst_48 : f32 to vector<16x128xf32>
    %145 = arith.maximumf %143, %144 : vector<16x128xf32>
    %c0_49 = arith.constant 0 : index
    %c0_50 = arith.constant 0 : index
    %146 = vector.load %arg4[%c0_49, %c0_50] : memref<32x16xf32, #tpu.memory_space<vmem>>, vector<32x16xf32>
    %147 = arith.truncf %146 : vector<32x16xf32> to vector<32x16xbf16>
    %148 = arith.truncf %145 : vector<16x128xf32> to vector<16x128xbf16>
    %cst_51 = arith.constant dense<0.000000e+00> : vector<32x128xf32>
    %149 = tpu.matmul %147, %148, %cst_51 {dimension_numbers = #tpu.dot_dimension_numbers<[1], [0], [0], [1], [0, 0, 1, 1], [], []>} : vector<32x16xbf16>, vector<16x128xbf16>, vector<32x128xf32> -> vector<32x128xf32>
    %c0_52 = arith.constant 0 : index
    %c0_53 = arith.constant 0 : index
    %150 = vector.load %arg5[%c0_52, %c0_53] : memref<128x256xbf16, #tpu.memory_space<vmem>>, vector<128x256xbf16>
    %151 = arith.truncf %149 : vector<32x128xf32> to vector<32x128xbf16>
    %cst_54 = arith.constant dense<0.000000e+00> : vector<32x256xf32>
    %152 = tpu.matmul %151, %150, %cst_54 {dimension_numbers = #tpu.dot_dimension_numbers<[1], [0], [0], [1], [0, 0, 1, 1], [], []>} : vector<32x128xbf16>, vector<128x256xbf16>, vector<32x256xf32> -> vector<32x256xf32>
    %c112_i32 = arith.constant 112 : i32
    %153 = tpu.dynamic_rotate %47 by %c112_i32 dim 1 : vector<16x128xf32>, i32 -> vector<16x128xf32>
    %c120_i32_55 = arith.constant 120 : i32
    %154 = tpu.dynamic_rotate %47 by %c120_i32_55 dim 1 : vector<16x128xf32>, i32 -> vector<16x128xf32>
    %c8_i32_56 = arith.constant 8 : i32
    %155 = tpu.dynamic_rotate %47 by %c8_i32_56 dim 1 : vector<16x128xf32>, i32 -> vector<16x128xf32>
    %c16_i32_57 = arith.constant 16 : i32
    %156 = tpu.dynamic_rotate %47 by %c16_i32_57 dim 1 : vector<16x128xf32>, i32 -> vector<16x128xf32>
    %c0_58 = arith.constant 0 : index
    %c0_59 = arith.constant 0 : index
    %157 = vector.load %arg8[%c0_58, %c0_59] : memref<16x128xf32, #tpu.memory_space<vmem>>, vector<1x128xf32>
    %158 = vector.shape_cast %157 : vector<1x128xf32> to vector<128xf32>
    %159 = vector.shape_cast %158 : vector<128xf32> to vector<1x128xf32>
    %160 = vector.broadcast %159 : vector<1x128xf32> to vector<16x128xf32>
    %161 = arith.mulf %153, %160 : vector<16x128xf32>
    %c2_60 = arith.constant 2 : index
    %c0_61 = arith.constant 0 : index
    %162 = vector.load %arg8[%c2_60, %c0_61] : memref<16x128xf32, #tpu.memory_space<vmem>>, vector<1x128xf32>
    %163 = vector.shape_cast %162 : vector<1x128xf32> to vector<128xf32>
    %164 = vector.shape_cast %163 : vector<128xf32> to vector<1x128xf32>
    %165 = vector.broadcast %164 : vector<1x128xf32> to vector<16x128xf32>
    %166 = arith.mulf %155, %165 : vector<16x128xf32>
    %167 = arith.addf %161, %166 : vector<16x128xf32>
    %c14_i32 = arith.constant 14 : i32
    %168 = tpu.dynamic_rotate %167 by %c14_i32 dim 0 : vector<16x128xf32>, i32 -> vector<16x128xf32>
    %cst_62 = arith.constant 0.000000e+00 : f32
    %169 = vector.broadcast %cst_62 : f32 to vector<16x128xf32>
    %170 = arith.select %36, %168, %169 : vector<16x128xi1>, vector<16x128xf32>
    %c8_63 = arith.constant 8 : index
    %c0_64 = arith.constant 0 : index
    %171 = vector.load %arg8[%c8_63, %c0_64] : memref<16x128xf32, #tpu.memory_space<vmem>>, vector<1x128xf32>
    %172 = vector.shape_cast %171 : vector<1x128xf32> to vector<128xf32>
    %173 = vector.shape_cast %172 : vector<128xf32> to vector<1x128xf32>
    %174 = vector.broadcast %173 : vector<1x128xf32> to vector<16x128xf32>
    %175 = arith.mulf %153, %174 : vector<16x128xf32>
    %c10 = arith.constant 10 : index
    %c0_65 = arith.constant 0 : index
    %176 = vector.load %arg8[%c10, %c0_65] : memref<16x128xf32, #tpu.memory_space<vmem>>, vector<1x128xf32>
    %177 = vector.shape_cast %176 : vector<1x128xf32> to vector<128xf32>
    %178 = vector.shape_cast %177 : vector<128xf32> to vector<1x128xf32>
    %179 = vector.broadcast %178 : vector<1x128xf32> to vector<16x128xf32>
    %180 = arith.mulf %155, %179 : vector<16x128xf32>
    %181 = arith.addf %175, %180 : vector<16x128xf32>
    %c1_i32_66 = arith.constant 1 : i32
    %182 = tpu.dynamic_rotate %181 by %c1_i32_66 dim 0 : vector<16x128xf32>, i32 -> vector<16x128xf32>
    %cst_67 = arith.constant 0.000000e+00 : f32
    %183 = vector.broadcast %cst_67 : f32 to vector<16x128xf32>
    %184 = arith.select %18, %182, %183 : vector<16x128xi1>, vector<16x128xf32>
    %185 = arith.addf %170, %184 : vector<16x128xf32>
    %c1_68 = arith.constant 1 : index
    %c0_69 = arith.constant 0 : index
    %186 = vector.load %arg8[%c1_68, %c0_69] : memref<16x128xf32, #tpu.memory_space<vmem>>, vector<1x128xf32>
    %187 = vector.shape_cast %186 : vector<1x128xf32> to vector<128xf32>
    %188 = vector.shape_cast %187 : vector<128xf32> to vector<1x128xf32>
    %189 = vector.broadcast %188 : vector<1x128xf32> to vector<16x128xf32>
    %190 = arith.mulf %154, %189 : vector<16x128xf32>
    %c3_70 = arith.constant 3 : index
    %c0_71 = arith.constant 0 : index
    %191 = vector.load %arg8[%c3_70, %c0_71] : memref<16x128xf32, #tpu.memory_space<vmem>>, vector<1x128xf32>
    %192 = vector.shape_cast %191 : vector<1x128xf32> to vector<128xf32>
    %193 = vector.shape_cast %192 : vector<128xf32> to vector<1x128xf32>
    %194 = vector.broadcast %193 : vector<1x128xf32> to vector<16x128xf32>
    %195 = arith.mulf %156, %194 : vector<16x128xf32>
    %196 = arith.addf %190, %195 : vector<16x128xf32>
    %c14_i32_72 = arith.constant 14 : i32
    %197 = tpu.dynamic_rotate %196 by %c14_i32_72 dim 0 : vector<16x128xf32>, i32 -> vector<16x128xf32>
    %cst_73 = arith.constant 0.000000e+00 : f32
    %198 = vector.broadcast %cst_73 : f32 to vector<16x128xf32>
    %199 = arith.select %36, %197, %198 : vector<16x128xi1>, vector<16x128xf32>
    %c9 = arith.constant 9 : index
    %c0_74 = arith.constant 0 : index
    %200 = vector.load %arg8[%c9, %c0_74] : memref<16x128xf32, #tpu.memory_space<vmem>>, vector<1x128xf32>
    %201 = vector.shape_cast %200 : vector<1x128xf32> to vector<128xf32>
    %202 = vector.shape_cast %201 : vector<128xf32> to vector<1x128xf32>
    %203 = vector.broadcast %202 : vector<1x128xf32> to vector<16x128xf32>
    %204 = arith.mulf %154, %203 : vector<16x128xf32>
    %c11 = arith.constant 11 : index
    %c0_75 = arith.constant 0 : index
    %205 = vector.load %arg8[%c11, %c0_75] : memref<16x128xf32, #tpu.memory_space<vmem>>, vector<1x128xf32>
    %206 = vector.shape_cast %205 : vector<1x128xf32> to vector<128xf32>
    %207 = vector.shape_cast %206 : vector<128xf32> to vector<1x128xf32>
    %208 = vector.broadcast %207 : vector<1x128xf32> to vector<16x128xf32>
    %209 = arith.mulf %156, %208 : vector<16x128xf32>
    %210 = arith.addf %204, %209 : vector<16x128xf32>
    %c1_i32_76 = arith.constant 1 : i32
    %211 = tpu.dynamic_rotate %210 by %c1_i32_76 dim 0 : vector<16x128xf32>, i32 -> vector<16x128xf32>
    %cst_77 = arith.constant 0.000000e+00 : f32
    %212 = vector.broadcast %cst_77 : f32 to vector<16x128xf32>
    %213 = arith.select %18, %211, %212 : vector<16x128xi1>, vector<16x128xf32>
    %214 = arith.addf %199, %213 : vector<16x128xf32>
    %c4_78 = arith.constant 4 : index
    %c0_79 = arith.constant 0 : index
    %215 = vector.load %arg8[%c4_78, %c0_79] : memref<16x128xf32, #tpu.memory_space<vmem>>, vector<1x128xf32>
    %216 = vector.shape_cast %215 : vector<1x128xf32> to vector<128xf32>
    %217 = vector.shape_cast %216 : vector<128xf32> to vector<1x128xf32>
    %218 = vector.broadcast %217 : vector<1x128xf32> to vector<16x128xf32>
    %219 = arith.mulf %153, %218 : vector<16x128xf32>
    %c6_80 = arith.constant 6 : index
    %c0_81 = arith.constant 0 : index
    %220 = vector.load %arg8[%c6_80, %c0_81] : memref<16x128xf32, #tpu.memory_space<vmem>>, vector<1x128xf32>
    %221 = vector.shape_cast %220 : vector<1x128xf32> to vector<128xf32>
    %222 = vector.shape_cast %221 : vector<128xf32> to vector<1x128xf32>
    %223 = vector.broadcast %222 : vector<1x128xf32> to vector<16x128xf32>
    %224 = arith.mulf %155, %223 : vector<16x128xf32>
    %225 = arith.addf %219, %224 : vector<16x128xf32>
    %c15_i32_82 = arith.constant 15 : i32
    %226 = tpu.dynamic_rotate %225 by %c15_i32_82 dim 0 : vector<16x128xf32>, i32 -> vector<16x128xf32>
    %cst_83 = arith.constant 0.000000e+00 : f32
    %227 = vector.broadcast %cst_83 : f32 to vector<16x128xf32>
    %228 = arith.select %27, %226, %227 : vector<16x128xi1>, vector<16x128xf32>
    %c12 = arith.constant 12 : index
    %c0_84 = arith.constant 0 : index
    %229 = vector.load %arg8[%c12, %c0_84] : memref<16x128xf32, #tpu.memory_space<vmem>>, vector<1x128xf32>
    %230 = vector.shape_cast %229 : vector<1x128xf32> to vector<128xf32>
    %231 = vector.shape_cast %230 : vector<128xf32> to vector<1x128xf32>
    %232 = vector.broadcast %231 : vector<1x128xf32> to vector<16x128xf32>
    %233 = arith.mulf %153, %232 : vector<16x128xf32>
    %c14 = arith.constant 14 : index
    %c0_85 = arith.constant 0 : index
    %234 = vector.load %arg8[%c14, %c0_85] : memref<16x128xf32, #tpu.memory_space<vmem>>, vector<1x128xf32>
    %235 = vector.shape_cast %234 : vector<1x128xf32> to vector<128xf32>
    %236 = vector.shape_cast %235 : vector<128xf32> to vector<1x128xf32>
    %237 = vector.broadcast %236 : vector<1x128xf32> to vector<16x128xf32>
    %238 = arith.mulf %155, %237 : vector<16x128xf32>
    %239 = arith.addf %233, %238 : vector<16x128xf32>
    %c2_i32_86 = arith.constant 2 : i32
    %240 = tpu.dynamic_rotate %239 by %c2_i32_86 dim 0 : vector<16x128xf32>, i32 -> vector<16x128xf32>
    %cst_87 = arith.constant 0.000000e+00 : f32
    %241 = vector.broadcast %cst_87 : f32 to vector<16x128xf32>
    %242 = arith.select %9, %240, %241 : vector<16x128xi1>, vector<16x128xf32>
    %243 = arith.addf %228, %242 : vector<16x128xf32>
    %c5_88 = arith.constant 5 : index
    %c0_89 = arith.constant 0 : index
    %244 = vector.load %arg8[%c5_88, %c0_89] : memref<16x128xf32, #tpu.memory_space<vmem>>, vector<1x128xf32>
    %245 = vector.shape_cast %244 : vector<1x128xf32> to vector<128xf32>
    %246 = vector.shape_cast %245 : vector<128xf32> to vector<1x128xf32>
    %247 = vector.broadcast %246 : vector<1x128xf32> to vector<16x128xf32>
    %248 = arith.mulf %154, %247 : vector<16x128xf32>
    %c7_90 = arith.constant 7 : index
    %c0_91 = arith.constant 0 : index
    %249 = vector.load %arg8[%c7_90, %c0_91] : memref<16x128xf32, #tpu.memory_space<vmem>>, vector<1x128xf32>
    %250 = vector.shape_cast %249 : vector<1x128xf32> to vector<128xf32>
    %251 = vector.shape_cast %250 : vector<128xf32> to vector<1x128xf32>
    %252 = vector.broadcast %251 : vector<1x128xf32> to vector<16x128xf32>
    %253 = arith.mulf %156, %252 : vector<16x128xf32>
    %254 = arith.addf %248, %253 : vector<16x128xf32>
    %c15_i32_92 = arith.constant 15 : i32
    %255 = tpu.dynamic_rotate %254 by %c15_i32_92 dim 0 : vector<16x128xf32>, i32 -> vector<16x128xf32>
    %cst_93 = arith.constant 0.000000e+00 : f32
    %256 = vector.broadcast %cst_93 : f32 to vector<16x128xf32>
    %257 = arith.select %27, %255, %256 : vector<16x128xi1>, vector<16x128xf32>
    %c13 = arith.constant 13 : index
    %c0_94 = arith.constant 0 : index
    %258 = vector.load %arg8[%c13, %c0_94] : memref<16x128xf32, #tpu.memory_space<vmem>>, vector<1x128xf32>
    %259 = vector.shape_cast %258 : vector<1x128xf32> to vector<128xf32>
    %260 = vector.shape_cast %259 : vector<128xf32> to vector<1x128xf32>
    %261 = vector.broadcast %260 : vector<1x128xf32> to vector<16x128xf32>
    %262 = arith.mulf %154, %261 : vector<16x128xf32>
    %c15 = arith.constant 15 : index
    %c0_95 = arith.constant 0 : index
    %263 = vector.load %arg8[%c15, %c0_95] : memref<16x128xf32, #tpu.memory_space<vmem>>, vector<1x128xf32>
    %264 = vector.shape_cast %263 : vector<1x128xf32> to vector<128xf32>
    %265 = vector.shape_cast %264 : vector<128xf32> to vector<1x128xf32>
    %266 = vector.broadcast %265 : vector<1x128xf32> to vector<16x128xf32>
    %267 = arith.mulf %156, %266 : vector<16x128xf32>
    %268 = arith.addf %262, %267 : vector<16x128xf32>
    %c2_i32_96 = arith.constant 2 : i32
    %269 = tpu.dynamic_rotate %268 by %c2_i32_96 dim 0 : vector<16x128xf32>, i32 -> vector<16x128xf32>
    %cst_97 = arith.constant 0.000000e+00 : f32
    %270 = vector.broadcast %cst_97 : f32 to vector<16x128xf32>
    %271 = arith.select %9, %269, %270 : vector<16x128xi1>, vector<16x128xf32>
    %272 = arith.addf %257, %271 : vector<16x128xf32>
    %273 = tpu.concatenate %185, %214, %243, %272 in 0 : vector<16x128xf32>, vector<16x128xf32>, vector<16x128xf32>, vector<16x128xf32> -> vector<64x128xf32>
    %c0_98 = arith.constant 0 : index
    %c0_99 = arith.constant 0 : index
    %274 = vector.load %arg7[%c0_98, %c0_99] : memref<128x128xbf16, #tpu.memory_space<vmem>>, vector<128x128xbf16>
    %275 = arith.truncf %273 : vector<64x128xf32> to vector<64x128xbf16>
    %cst_100 = arith.constant dense<0.000000e+00> : vector<64x128xf32>
    %276 = tpu.matmul %275, %274, %cst_100 {dimension_numbers = #tpu.dot_dimension_numbers<[1], [0], [0], [1], [0, 0, 1, 1], [], []>} : vector<64x128xbf16>, vector<128x128xbf16>, vector<64x128xf32> -> vector<64x128xf32>
    %c4_101 = arith.constant 4 : index
    %c0_102 = arith.constant 0 : index
    %277 = vector.load %arg10[%c4_101, %c0_102] : memref<6x128xf32, #tpu.memory_space<vmem>>, vector<1x128xf32>
    %278 = vector.shape_cast %277 : vector<1x128xf32> to vector<128xf32>
    %279 = vector.shape_cast %278 : vector<128xf32> to vector<1x128xf32>
    %280 = vector.broadcast %279 : vector<1x128xf32> to vector<64x128xf32>
    %281 = arith.addf %276, %280 : vector<64x128xf32>
    %cst_103 = arith.constant 0.000000e+00 : f32
    %282 = vector.broadcast %cst_103 : f32 to vector<64x128xf32>
    %283 = arith.maximumf %281, %282 : vector<64x128xf32>
    %284 = vector.extract_strided_slice %283 {offsets = [0, 0], sizes = [16, 128], strides = [1, 1]} : vector<64x128xf32> to vector<16x128xf32>
    %285 = vector.extract_strided_slice %152 {offsets = [0, 0], sizes = [16, 128], strides = [1, 1]} : vector<32x256xf32> to vector<16x128xf32>
    %286 = arith.addf %284, %285 : vector<16x128xf32>
    %287 = arith.addf %286, %63 : vector<16x128xf32>
    %cst_104 = arith.constant 0.000000e+00 : f32
    %288 = vector.broadcast %cst_104 : f32 to vector<16x128xf32>
    %289 = arith.maximumf %287, %288 : vector<16x128xf32>
    %c0_105 = arith.constant 0 : index
    %c0_106 = arith.constant 0 : index
    %c0_107 = arith.constant 0 : index
    %c0_108 = arith.constant 0 : index
    %290 = vector.load %arg11[%c0_105, %c0_106, %c0_107, %c0_108] : memref<1x4x16x128xf32, #tpu.memory_space<vmem>>, vector<1x1x16x128xf32>
    %291 = vector.shape_cast %290 : vector<1x1x16x128xf32> to vector<16x128xf32>
    %292 = vector.shape_cast %289 : vector<16x128xf32> to vector<1x1x16x128xf32>
    tpu.vector_store %arg11[%c0_105, %c0_106, %c0_107, %c0_108], %292 {strides = array<i32>} : memref<1x4x16x128xf32, #tpu.memory_space<vmem>>, vector<1x1x16x128xf32>,
    %293 = vector.extract_strided_slice %283 {offsets = [16, 0], sizes = [16, 128], strides = [1, 1]} : vector<64x128xf32> to vector<16x128xf32>
    %294 = vector.extract_strided_slice %152 {offsets = [0, 128], sizes = [16, 128], strides = [1, 1]} : vector<32x256xf32> to vector<16x128xf32>
    %295 = arith.addf %293, %294 : vector<16x128xf32>
    %296 = arith.addf %295, %63 : vector<16x128xf32>
    %cst_109 = arith.constant 0.000000e+00 : f32
    %297 = vector.broadcast %cst_109 : f32 to vector<16x128xf32>
    %298 = arith.maximumf %296, %297 : vector<16x128xf32>
    %c0_110 = arith.constant 0 : index
    %c1_111 = arith.constant 1 : index
    %c0_112 = arith.constant 0 : index
    %c0_113 = arith.constant 0 : index
    %299 = vector.load %arg11[%c0_110, %c1_111, %c0_112, %c0_113] : memref<1x4x16x128xf32, #tpu.memory_space<vmem>>, vector<1x1x16x128xf32>
    %300 = vector.shape_cast %299 : vector<1x1x16x128xf32> to vector<16x128xf32>
    %301 = vector.shape_cast %298 : vector<16x128xf32> to vector<1x1x16x128xf32>
    tpu.vector_store %arg11[%c0_110, %c1_111, %c0_112, %c0_113], %301 {strides = array<i32>} : memref<1x4x16x128xf32, #tpu.memory_space<vmem>>, vector<1x1x16x128xf32>,
    %302 = vector.extract_strided_slice %283 {offsets = [32, 0], sizes = [16, 128], strides = [1, 1]} : vector<64x128xf32> to vector<16x128xf32>
    %303 = vector.extract_strided_slice %152 {offsets = [16, 0], sizes = [16, 128], strides = [1, 1]} : vector<32x256xf32> to vector<16x128xf32>
    %304 = arith.addf %302, %303 : vector<16x128xf32>
    %305 = arith.addf %304, %63 : vector<16x128xf32>
    %cst_114 = arith.constant 0.000000e+00 : f32
    %306 = vector.broadcast %cst_114 : f32 to vector<16x128xf32>
    %307 = arith.maximumf %305, %306 : vector<16x128xf32>
    %c0_115 = arith.constant 0 : index
    %c2_116 = arith.constant 2 : index
    %c0_117 = arith.constant 0 : index
    %c0_118 = arith.constant 0 : index
    %308 = vector.load %arg11[%c0_115, %c2_116, %c0_117, %c0_118] : memref<1x4x16x128xf32, #tpu.memory_space<vmem>>, vector<1x1x16x128xf32>
    %309 = vector.shape_cast %308 : vector<1x1x16x128xf32> to vector<16x128xf32>
    %310 = vector.shape_cast %307 : vector<16x128xf32> to vector<1x1x16x128xf32>
    tpu.vector_store %arg11[%c0_115, %c2_116, %c0_117, %c0_118], %310 {strides = array<i32>} : memref<1x4x16x128xf32, #tpu.memory_space<vmem>>, vector<1x1x16x128xf32>,
    %311 = vector.extract_strided_slice %283 {offsets = [48, 0], sizes = [16, 128], strides = [1, 1]} : vector<64x128xf32> to vector<16x128xf32>
    %312 = vector.extract_strided_slice %152 {offsets = [16, 128], sizes = [16, 128], strides = [1, 1]} : vector<32x256xf32> to vector<16x128xf32>
    %313 = arith.addf %311, %312 : vector<16x128xf32>
    %314 = arith.addf %313, %63 : vector<16x128xf32>
    %cst_119 = arith.constant 0.000000e+00 : f32
    %315 = vector.broadcast %cst_119 : f32 to vector<16x128xf32>
    %316 = arith.maximumf %314, %315 : vector<16x128xf32>
    %c0_120 = arith.constant 0 : index
    %c3_121 = arith.constant 3 : index
    %c0_122 = arith.constant 0 : index
    %c0_123 = arith.constant 0 : index
    %317 = vector.load %arg11[%c0_120, %c3_121, %c0_122, %c0_123] : memref<1x4x16x128xf32, #tpu.memory_space<vmem>>, vector<1x1x16x128xf32>
    %318 = vector.shape_cast %317 : vector<1x1x16x128xf32> to vector<16x128xf32>
    %319 = vector.shape_cast %316 : vector<16x128xf32> to vector<1x1x16x128xf32>
    tpu.vector_store %arg11[%c0_120, %c3_121, %c0_122, %c0_123], %319 {strides = array<i32>} : memref<1x4x16x128xf32, #tpu.memory_space<vmem>>, vector<1x1x16x128xf32>,
    return
  }
  func.func @transform_0(%arg0: i32) -> (i32, i32, i32) {
    %c0_i32 = arith.constant 0 : i32
    %c0_i32_0 = arith.constant 0 : i32
    %c0_i32_1 = arith.constant 0 : i32
    return %arg0, %c0_i32, %c0_i32_0 : i32, i32, i32
  }
  func.func @transform_1(%arg0: i32) -> (i32, i32) {
    %c0_i32 = arith.constant 0 : i32
    %c0_i32_0 = arith.constant 0 : i32
    %c0_i32_1 = arith.constant 0 : i32
    return %c0_i32, %c0_i32_0 : i32, i32
  }
  func.func @transform_2(%arg0: i32) -> (i32, i32) {
    %c0_i32 = arith.constant 0 : i32
    %c0_i32_0 = arith.constant 0 : i32
    %c0_i32_1 = arith.constant 0 : i32
    return %c0_i32, %c0_i32_0 : i32, i32
  }
  func.func @transform_3(%arg0: i32) -> (i32, i32) {
    %c0_i32 = arith.constant 0 : i32
    %c0_i32_0 = arith.constant 0 : i32
    %c0_i32_1 = arith.constant 0 : i32
    return %c0_i32, %c0_i32_0 : i32, i32
  }
  func.func @transform_4(%arg0: i32) -> (i32, i32) {
    %c0_i32 = arith.constant 0 : i32
    %c0_i32_0 = arith.constant 0 : i32
    %c0_i32_1 = arith.constant 0 : i32
    return %c0_i32, %c0_i32_0 : i32, i32
  }
  func.func @transform_5(%arg0: i32) -> (i32, i32) {
    %c0_i32 = arith.constant 0 : i32
    %c0_i32_0 = arith.constant 0 : i32
    %c0_i32_1 = arith.constant 0 : i32
    return %c0_i32, %c0_i32_0 : i32, i32
  }
  func.func @transform_6(%arg0: i32) -> (i32, i32) {
    %c0_i32 = arith.constant 0 : i32
    %c0_i32_0 = arith.constant 0 : i32
    %c0_i32_1 = arith.constant 0 : i32
    return %c0_i32, %c0_i32_0 : i32, i32
  }
  func.func @transform_7(%arg0: i32) -> (i32, i32) {
    %c0_i32 = arith.constant 0 : i32
    %c0_i32_0 = arith.constant 0 : i32
    %c0_i32_1 = arith.constant 0 : i32
    return %c0_i32, %c0_i32_0 : i32, i32
  }
  func.func @transform_8(%arg0: i32) -> (i32, i32) {
    %c0_i32 = arith.constant 0 : i32
    %c0_i32_0 = arith.constant 0 : i32
    %c0_i32_1 = arith.constant 0 : i32
    return %c0_i32, %c0_i32_0 : i32, i32
  }
  func.func @transform_9(%arg0: i32) -> (i32, i32) {
    %c0_i32 = arith.constant 0 : i32
    %c0_i32_0 = arith.constant 0 : i32
    %c0_i32_1 = arith.constant 0 : i32
    return %c0_i32, %c0_i32_0 : i32, i32
  }
  func.func @transform_10(%arg0: i32) -> (i32, i32, i32, i32) {
    %c0_i32 = arith.constant 0 : i32
    %c0_i32_0 = arith.constant 0 : i32
    %c0_i32_1 = arith.constant 0 : i32
    %c0_i32_2 = arith.constant 0 : i32
    return %arg0, %c0_i32, %c0_i32_0, %c0_i32_1 : i32, i32, i32, i32
  }
}

</mosaic_0001>

<llo_original>
// kernel: tile.293
$region0: #{tile.293}
  #allocation0 [shape = 's32[1]{0}', space=sflag, size = 0x4, scoped, tag = 'scoped memory for tile.293']
  %s0 = inlined_call_operand.vmem [shape: f32[8], index: 0, kind: input, shape index: {}]
  %s1 = inlined_call_operand.vmem [shape: f32[16,8], index: 1, kind: output, shape index: {}]
  // Predicated region
  $region2: #{tile.293} parent=0 // pred_check
    _
  $region3: #{tile.293} parent=0 // pred_check_branch
    %3 = sbr.rel (0) target = $region5
  $region4: #{tile.293} parent=0 // pred_region
    _
  $region5: #{tile.293} parent=0 // pred_fallthru
    _
  %v4 = vld [vmem:[%s0] ss:$0 sm:$0xff]
  %5 = vst [vmem:[%s1] sm:$0xff] %v4
  %s6 = scalar_lea.vmem %s1, 8
  %7 = vst [vmem:[%s6] sm:$0xff] %v4

// kernel: tile.294
$region0: #{tile.294}
  %s0 = inlined_call_operand.vmem [shape: f32[16,8], index: 0, kind: input, shape index: {}]
  %s1 = inlined_call_operand.vmem [shape: f32[128], index: 1, kind: output, shape index: {}]
  $region1: #{tile.294} parent=0
    #allocation0 [shape = 'u8[4096]{0}', space=vmem, size = 0x1000, scoped, tag = 'scoped mem for output reshape']
    %v2 = vld [vmem:[%s0] sm:$0x1]
    %vm3 = vcmask 64512
    %4 = vst.msk [vmem:[#allocation0] sm:$0x1] %vm3, %v2
    %s5 = scalar_lea.vmem %s0, 15
    %v6 = vld [vmem:[%s5] sm:$0x1]
    %7 = vrot.lane.b32.xlu0 %v6, 120
    %v8 = vpop.permute.xlu0 %7
    %vm9 = vcmask 1048512
    %10 = vst.msk [vmem:[#allocation0] sm:$0x1] %vm9, %v8
    %s11 = scalar_lea.vmem %s0, 14
    %v12 = vld [vmem:[%s11] sm:$0x1]
    %13 = vrot.lane.b32.xlu0 %v12, 112
    %v14 = vpop.permute.xlu0 %13
    %vm15 = vcmask 982912
    %16 = vst.msk [vmem:[#allocation0] sm:$0x1] %vm15, %v14
    %s17 = scalar_lea.vmem %s0, 13
    %v18 = vld [vmem:[%s17] sm:$0x1]
    %19 = vrot.lane.b32.xlu0 %v18, 104
    %v20 = vpop.permute.xlu0 %19
    %vm21 = vcmask 917312
    %22 = vst.msk [vmem:[#allocation0] sm:$0x1] %vm21, %v20
    %s23 = scalar_lea.vmem %s0, 12
    %v24 = vld [vmem:[%s23] sm:$0x1]
    %25 = vrot.lane.b32.xlu0 %v24, 96
    %v26 = vpop.permute.xlu0 %25
    %vm27 = vcmask 851712
    %28 = vst.msk [vmem:[#allocation0] sm:$0x1] %vm27, %v26
    %s29 = scalar_lea.vmem %s0, 11
    %v30 = vld [vmem:[%s29] sm:$0x1]
    %31 = vrot.lane.b32.xlu0 %v30, 88
    %v32 = vpop.permute.xlu0 %31
    %vm33 = vcmask 786112
    %34 = vst.msk [vmem:[#allocation0] sm:$0x1] %vm33, %v32
    %s35 = scalar_lea.vmem %s0, 10
    %v36 = vld [vmem:[%s35] sm:$0x1]
    %37 = vrot.lane.b32.xlu0 %v36, 80
    %v38 = vpop.permute.xlu0 %37
    %vm39 = vcmask 720512
    %40 = vst.msk [vmem:[#allocation0] sm:$0x1] %vm39, %v38
    %s41 = scalar_lea.vmem %s0, 9
    %v42 = vld [vmem:[%s41] sm:$0x1]
    %43 = vrot.lane.b32.xlu0 %v42, 72
    %v44 = vpop.permute.xlu0 %43
    %vm45 = vcmask 654912
    %46 = vst.msk [vmem:[#allocation0] sm:$0x1] %vm45, %v44
    %s47 = scalar_lea.vmem %s0, 8
    %v48 = vld [vmem:[%s47] sm:$0x1]
    %49 = vrot.lane.b32.xlu0 %v48, 64
    %v50 = vpop.permute.xlu0 %49
    %vm51 = vcmask 589312
    %52 = vst.msk [vmem:[#allocation0] sm:$0x1] %vm51, %v50
    %s53 = scalar_lea.vmem %s0, 7
    %v54 = vld [vmem:[%s53] sm:$0x1]
    %55 = vrot.lane.b32.xlu0 %v54, 56
    %v56 = vpop.permute.xlu0 %55
    %vm57 = vcmask 523712
    %58 = vst.msk [vmem:[#allocation0] sm:$0x1] %vm57, %v56
    %s59 = scalar_lea.vmem %s0, 6
    %v60 = vld [vmem:[%s59] sm:$0x1]
    %61 = vrot.lane.b32.xlu0 %v60, 48
    %v62 = vpop.permute.xlu0 %61
    %vm63 = vcmask 458112
    %64 = vst.msk [vmem:[#allocation0] sm:$0x1] %vm63, %v62
    %s65 = scalar_lea.vmem %s0, 5
    %v66 = vld [vmem:[%s65] sm:$0x1]
    %67 = vrot.lane.b32.xlu0 %v66, 40
    %v68 = vpop.permute.xlu0 %67
    %vm69 = vcmask 392512
    %70 = vst.msk [vmem:[#allocation0] sm:$0x1] %vm69, %v68
    %s71 = scalar_lea.vmem %s0, 4
    %v72 = vld [vmem:[%s71] sm:$0x1]
    %73 = vrot.lane.b32.xlu0 %v72, 32
    %v74 = vpop.permute.xlu0 %73
    %vm75 = vcmask 326912
    %76 = vst.msk [vmem:[#allocation0] sm:$0x1] %vm75, %v74
    %s77 = scalar_lea.vmem %s0, 3
    %v78 = vld [vmem:[%s77] sm:$0x1]
    %79 = vrot.lane.b32.xlu0 %v78, 24
    %v80 = vpop.permute.xlu0 %79
    %vm81 = vcmask 261312
    %82 = vst.msk [vmem:[#allocation0] sm:$0x1] %vm81, %v80
    %s83 = scalar_lea.vmem %s0, 2
    %v84 = vld [vmem:[%s83] sm:$0x1]
    %85 = vrot.lane.b32.xlu0 %v84, 16
    %v86 = vpop.permute.xlu0 %85
    %vm87 = vcmask 195712
    %88 = vst.msk [vmem:[#allocation0] sm:$0x1] %vm87, %v86
    %s89 = scalar_lea.vmem %s0, 1
    %v90 = vld [vmem:[%s89] sm:$0x1]
    %91 = vrot.lane.b32.xlu0 %v90, 8
    %v92 = vpop.permute.xlu0 %91
    %vm93 = vcmask 130112
    %94 = vst.msk [vmem:[#allocation0] sm:$0x1] %vm93, %v92
    %s96 = ssub.s32 2, 1
    %v97 = vld [vmem:[#allocation0] sm:%s96]
    %s99 = ssub.s32 2, 1
    %100 = vst [vmem:[%s1] sm:%s99] %v97

// kernel: pyramid_upsample.1
$region0: #{pyramid_upsample.1}
  #allocation0 [shape = 'u32[]', space=smem, size = 0x4, offset = 0x4, fixed_abs, tag = 'smem constant byte address 0x4 - core index']
  #allocation1 [shape = 'u32[72,128]{1,0:T(1,128)}', space=vmem, size = 0x9000, scoped, tag = 'internal scratch']
  %s0 = inlined_call_operand.vmem [shape: f32[2,16,64], index: 0, kind: input, shape index: {}]
  %s1 = inlined_call_operand.vmem [shape: bf16[64,384], index: 1, kind: input, shape index: {}]
  %s2 = inlined_call_operand.vmem [shape: f32[16,16], index: 2, kind: input, shape index: {}]
  %s3 = inlined_call_operand.vmem [shape: f32[32,16], index: 3, kind: input, shape index: {}]
  %s4 = inlined_call_operand.vmem [shape: bf16[128,256], index: 4, kind: input, shape index: {}]
  %s5 = inlined_call_operand.vmem [shape: bf16[128,128], index: 5, kind: input, shape index: {}]
  %s6 = inlined_call_operand.vmem [shape: bf16[128,128], index: 6, kind: input, shape index: {}]
  %s7 = inlined_call_operand.vmem [shape: f32[16,128], index: 7, kind: input, shape index: {}]
  %s8 = inlined_call_operand.vmem [shape: f32[9,128], index: 8, kind: input, shape index: {}]
  %s9 = inlined_call_operand.vmem [shape: f32[6,128], index: 9, kind: input, shape index: {}]
  %s10 = inlined_call_operand.vmem [shape: f32[2,4,16,128], index: 10, kind: output, shape index: {}]
  %s11 = sld [smem:[#allocation0]]
  $region73: #{pyramid_upsample.1} parent=0
    _
  %s13 = ssub.s32 1, %s11
  %s14 = scalar_select 0, %s13, %s11
  loop: start=0, step=1, limit=4
  $region2: #{pyramid_upsample.1} parent=0 // loop_pre_header
    _
  $region3: #{pyramid_upsample.1} parent=0 // loop_header
    %s16 = sphi 0, %s20
    %p17 = scmp.ge.s32.totalorder %s16, 4
    %s26 = sphi 0, %s28
    %s29 = sphi 0, %s26
    %s30 = sphi 0, %s29
    %s46 = sphi 0, %s30
    %s50 = sphi 0, %s50
    %s52 = sphi 0, %s50
    %s53 = sphi 0, %s52
    %s67 = sphi 0, %s53
    %s71 = sphi 0, %s71
    %s73 = sphi 0, %s71
    %s74 = sphi 0, %s73
    %s88 = sphi 0, %s74
    %s92 = sphi 0, %s92
    %s94 = sphi 0, %s92
    %s95 = sphi 0, %s94
    %s109 = sphi 0, %s95
    %s113 = sphi 0, %s113
    %s115 = sphi 0, %s113
    %s116 = sphi 0, %s115
    %s130 = sphi 0, %s116
    %s134 = sphi 0, %s134
    %s136 = sphi 0, %s134
    %s137 = sphi 0, %s136
    %s151 = sphi 0, %s137
    %s155 = sphi 0, %s155
    %s157 = sphi 0, %s155
    %s158 = sphi 0, %s157
    %s172 = sphi 0, %s158
    %s176 = sphi 0, %s176
    %s178 = sphi 0, %s176
    %s179 = sphi 0, %s178
    %s193 = sphi 0, %s179
    %s197 = sphi 0, %s197
    %s199 = sphi 0, %s197
    %s200 = sphi 0, %s199
    %s214 = sphi 0, %s200
    %s218 = sphi 0, %s218
    %s220 = sphi 0, %s218
    %s221 = sphi 0, %s220
    %s235 = sphi 0, %s221
    %s241 = sphi 0, %s243
    %s244 = sphi 0, %s241
    %s245 = sphi 0, %s244
    %s261 = sphi 0, %s245
  $region4: #{pyramid_upsample.1} parent=0 // loop_header_branch
    %19 = sbr.rel (%p17) target = $region8
  $region5: #{pyramid_upsample.1} parent=0 // loop_body
    %s21 = ssub.s32 %s16, 1
    %s22 = ssub.s32 %s16, 2
    %s23 = sadd.s32 %s16, 1
    %s24 = ssub.s32 %s16, %s23
    %p25 = scmp.eq.s32.totalorder %s24, 0
    %s27 = sadd.s32 %s26, 1
    %s28 = scalar_select %p25, %s26, %s27
    %p31 = pneg %p25
    %p32 = scmp.eq.s32.totalorder %s16, 1
    %p33 = por %p31, %p32
    %p34 = scmp.ne.s32.totalorder %s26, %s29
    %p35 = scmp.eq.s32.totalorder %s16, 0
    %p36 = por %p34, %p35
    %p37 = scmp.ne.s32.totalorder %s26, %s29
    %p38 = scmp.eq.s32.totalorder %s21, 1
    %p39 = por %p37, %p38
    %p40 = scmp.ne.s32.totalorder %s29, %s30
    %p41 = scmp.eq.s32.totalorder %s21, 0
    %p42 = por %p40, %p41
    %p43 = scmp.ne.s32.totalorder %s29, %s30
    %p44 = scmp.eq.s32.totalorder %s22, 1
    %p45 = por %p43, %p44
    %p47 = scmp.ne.s32.totalorder %s30, %s46
    %p48 = scmp.eq.s32.totalorder %s22, 0
    %p49 = por %p47, %p48
    %s51 = sadd.s32 %s50, 1
    %p54 = scmp.eq.s32.totalorder %s16, 1
    %p55 = scmp.ne.s32.totalorder %s50, %s52
    %p56 = scmp.eq.s32.totalorder %s16, 0
    %p57 = por %p55, %p56
    %p58 = scmp.ne.s32.totalorder %s50, %s52
    %p59 = scmp.eq.s32.totalorder %s21, 1
    %p60 = por %p58, %p59
    %p61 = scmp.ne.s32.totalorder %s52, %s53
    %p62 = scmp.eq.s32.totalorder %s21, 0
    %p63 = por %p61, %p62
    %p64 = scmp.ne.s32.totalorder %s52, %s53
    %p65 = scmp.eq.s32.totalorder %s22, 1
    %p66 = por %p64, %p65
    %p68 = scmp.ne.s32.totalorder %s53, %s67
    %p69 = scmp.eq.s32.totalorder %s22, 0
    %p70 = por %p68, %p69
    %s72 = sadd.s32 %s71, 1
    %p75 = scmp.eq.s32.totalorder %s16, 1
    %p76 = scmp.ne.s32.totalorder %s71, %s73
    %p77 = scmp.eq.s32.totalorder %s16, 0
    %p78 = por %p76, %p77
    %p79 = scmp.ne.s32.totalorder %s71, %s73
    %p80 = scmp.eq.s32.totalorder %s21, 1
    %p81 = por %p79, %p80
    %p82 = scmp.ne.s32.totalorder %s73, %s74
    %p83 = scmp.eq.s32.totalorder %s21, 0
    %p84 = por %p82, %p83
    %p85 = scmp.ne.s32.totalorder %s73, %s74
    %p86 = scmp.eq.s32.totalorder %s22, 1
    %p87 = por %p85, %p86
    %p89 = scmp.ne.s32.totalorder %s74, %s88
    %p90 = scmp.eq.s32.totalorder %s22, 0
    %p91 = por %p89, %p90
    %s93 = sadd.s32 %s92, 1
    %p96 = scmp.eq.s32.totalorder %s16, 1
    %p97 = scmp.ne.s32.totalorder %s92, %s94
    %p98 = scmp.eq.s32.totalorder %s16, 0
    %p99 = por %p97, %p98
    %p100 = scmp.ne.s32.totalorder %s92, %s94
    %p101 = scmp.eq.s32.totalorder %s21, 1
    %p102 = por %p100, %p101
    %p103 = scmp.ne.s32.totalorder %s94, %s95
    %p104 = scmp.eq.s32.totalorder %s21, 0
    %p105 = por %p103, %p104
    %p106 = scmp.ne.s32.totalorder %s94, %s95
    %p107 = scmp.eq.s32.totalorder %s22, 1
    %p108 = por %p106, %p107
    %p110 = scmp.ne.s32.totalorder %s95, %s109
    %p111 = scmp.eq.s32.totalorder %s22, 0
    %p112 = por %p110, %p111
    %s114 = sadd.s32 %s113, 1
    %p117 = scmp.eq.s32.totalorder %s16, 1
    %p118 = scmp.ne.s32.totalorder %s113, %s115
    %p119 = scmp.eq.s32.totalorder %s16, 0
    %p120 = por %p118, %p119
    %p121 = scmp.ne.s32.totalorder %s113, %s115
    %p122 = scmp.eq.s32.totalorder %s21, 1
    %p123 = por %p121, %p122
    %p124 = scmp.ne.s32.totalorder %s115, %s116
    %p125 = scmp.eq.s32.totalorder %s21, 0
    %p126 = por %p124, %p125
    %p127 = scmp.ne.s32.totalorder %s115, %s116
    %p128 = scmp.eq.s32.totalorder %s22, 1
    %p129 = por %p127, %p128
    %p131 = scmp.ne.s32.totalorder %s116, %s130
    %p132 = scmp.eq.s32.totalorder %s22, 0
    %p133 = por %p131, %p132
    %s135 = sadd.s32 %s134, 1
    %p138 = scmp.eq.s32.totalorder %s16, 1
    %p139 = scmp.ne.s32.totalorder %s134, %s136
    %p140 = scmp.eq.s32.totalorder %s16, 0
    %p141 = por %p139, %p140
    %p142 = scmp.ne.s32.totalorder %s134, %s136
    %p143 = scmp.eq.s32.totalorder %s21, 1
    %p144 = por %p142, %p143
    %p145 = scmp.ne.s32.totalorder %s136, %s137
    %p146 = scmp.eq.s32.totalorder %s21, 0
    %p147 = por %p145, %p146
    %p148 = scmp.ne.s32.totalorder %s136, %s137
    %p149 = scmp.eq.s32.totalorder %s22, 1
    %p150 = por %p148, %p149
    %p152 = scmp.ne.s32.totalorder %s137, %s151
    %p153 = scmp.eq.s32.totalorder %s22, 0
    %p154 = por %p152, %p153
    %s156 = sadd.s32 %s155, 1
    %p159 = scmp.eq.s32.totalorder %s16, 1
    %p160 = scmp.ne.s32.totalorder %s155, %s157
    %p161 = scmp.eq.s32.totalorder %s16, 0
    %p162 = por %p160, %p161
    %p163 = scmp.ne.s32.totalorder %s155, %s157
    %p164 = scmp.eq.s32.totalorder %s21, 1
    %p165 = por %p163, %p164
    %p166 = scmp.ne.s32.totalorder %s157, %s158
    %p167 = scmp.eq.s32.totalorder %s21, 0
    %p168 = por %p166, %p167
    %p169 = scmp.ne.s32.totalorder %s157, %s158
    %p170 = scmp.eq.s32.totalorder %s22, 1
    %p171 = por %p169, %p170
    %p173 = scmp.ne.s32.totalorder %s158, %s172
    %p174 = scmp.eq.s32.totalorder %s22, 0
    %p175 = por %p173, %p174
    %s177 = sadd.s32 %s176, 1
    %p180 = scmp.eq.s32.totalorder %s16, 1
    %p181 = scmp.ne.s32.totalorder %s176, %s178
    %p182 = scmp.eq.s32.totalorder %s16, 0
    %p183 = por %p181, %p182
    %p184 = scmp.ne.s32.totalorder %s176, %s178
    %p185 = scmp.eq.s32.totalorder %s21, 1
    %p186 = por %p184, %p185
    %p187 = scmp.ne.s32.totalorder %s178, %s179
    %p188 = scmp.eq.s32.totalorder %s21, 0
    %p189 = por %p187, %p188
    %p190 = scmp.ne.s32.totalorder %s178, %s179
    %p191 = scmp.eq.s32.totalorder %s22, 1
    %p192 = por %p190, %p191
    %p194 = scmp.ne.s32.totalorder %s179, %s193
    %p195 = scmp.eq.s32.totalorder %s22, 0
    %p196 = por %p194, %p195
    %s198 = sadd.s32 %s197, 1
    %p201 = scmp.eq.s32.totalorder %s16, 1
    %p202 = scmp.ne.s32.totalorder %s197, %s199
    %p203 = scmp.eq.s32.totalorder %s16, 0
    %p204 = por %p202, %p203
    %p205 = scmp.ne.s32.totalorder %s197, %s199
    %p206 = scmp.eq.s32.totalorder %s21, 1
    %p207 = por %p205, %p206
    %p208 = scmp.ne.s32.totalorder %s199, %s200
    %p209 = scmp.eq.s32.totalorder %s21, 0
    %p210 = por %p208, %p209
    %p211 = scmp.ne.s32.totalorder %s199, %s200
    %p212 = scmp.eq.s32.totalorder %s22, 1
    %p213 = por %p211, %p212
    %p215 = scmp.ne.s32.totalorder %s200, %s214
    %p216 = scmp.eq.s32.totalorder %s22, 0
    %p217 = por %p215, %p216
    %s219 = sadd.s32 %s218, 1
    %p222 = scmp.eq.s32.totalorder %s16, 1
    %p223 = scmp.ne.s32.totalorder %s218, %s220
    %p224 = scmp.eq.s32.totalorder %s16, 0
    %p225 = por %p223, %p224
    %p226 = scmp.ne.s32.totalorder %s218, %s220
    %p227 = scmp.eq.s32.totalorder %s21, 1
    %p228 = por %p226, %p227
    %p229 = scmp.ne.s32.totalorder %s220, %s221
    %p230 = scmp.eq.s32.totalorder %s21, 0
    %p231 = por %p229, %p230
    %p232 = scmp.ne.s32.totalorder %s220, %s221
    %p233 = scmp.eq.s32.totalorder %s22, 1
    %p234 = por %p232, %p233
    %p236 = scmp.ne.s32.totalorder %s221, %s235
    %p237 = scmp.eq.s32.totalorder %s22, 0
    %p238 = por %p236, %p237
    %s239 = ssub.s32 %s16, %s23
    %p240 = scmp.eq.s32.totalorder %s239, 0
    %s242 = sadd.s32 %s241, 1
    %s243 = scalar_select %p240, %s241, %s242
    %p246 = pneg %p240
    %p247 = scmp.eq.s32.totalorder %s16, 1
    %p248 = por %p246, %p247
    %p249 = scmp.ne.s32.totalorder %s241, %s244
    %p250 = scmp.eq.s32.totalorder %s16, 0
    %p251 = por %p249, %p250
    %p252 = scmp.ne.s32.totalorder %s241, %s244
    %p253 = scmp.eq.s32.totalorder %s21, 1
    %p254 = por %p252, %p253
    %p255 = scmp.ne.s32.totalorder %s244, %s245
    %p256 = scmp.eq.s32.totalorder %s21, 0
    %p257 = por %p255, %p256
    %p258 = scmp.ne.s32.totalorder %s244, %s245
    %p259 = scmp.eq.s32.totalorder %s22, 1
    %p260 = por %p258, %p259
    %p262 = scmp.ne.s32.totalorder %s245, %s261
    %p263 = scmp.eq.s32.totalorder %s22, 0
    %p264 = por %p262, %p263
    %p265 = scmp.le.s32.totalorder 1, %s16
    %p266 = scmp.lt.s32.totalorder %s16, 3
    %p267 = pnand %p265, %p266
    %p268 = pneg %p267
    // Predicated region
    $region9: #{pyramid_upsample.1} parent=5 // pred_check
      _
    $region10: #{pyramid_upsample.1} parent=5 // pred_check_branch
      %270 = sbr.rel (%p267) target = $region12
    $region11: #{pyramid_upsample.1} parent=5 // pred_region
      %s271 = ssub.s32 %s16, 1
      // Predicated region
      $region13: #{pyramid_upsample.1} parent=11 // pred_check
        %p272 = pneg %p63
      $region14: #{pyramid_upsample.1} parent=11 // pred_check_branch
        %274 = sbr.rel (%p272) target = $region16
      $region15: #{pyramid_upsample.1} parent=11 // pred_region
        _
      $region16: #{pyramid_upsample.1} parent=11 // pred_fallthru
        _
      // Predicated region
      $region17: #{pyramid_upsample.1} parent=11 // pred_check
        %p275 = pneg %p84
      $region18: #{pyramid_upsample.1} parent=11 // pred_check_branch
        %277 = sbr.rel (%p275) target = $region20
      $region19: #{pyramid_upsample.1} parent=11 // pred_region
        _
      $region20: #{pyramid_upsample.1} parent=11 // pred_fallthru
        _
      // Predicated region
      $region21: #{pyramid_upsample.1} parent=11 // pred_check
        %p278 = pneg %p105
      $region22: #{pyramid_upsample.1} parent=11 // pred_check_branch
        %280 = sbr.rel (%p278) target = $region24
      $region23: #{pyramid_upsample.1} parent=11 // pred_region
        _
      $region24: #{pyramid_upsample.1} parent=11 // pred_fallthru
        _
      // Predicated region
      $region25: #{pyramid_upsample.1} parent=11 // pred_check
        %p281 = pneg %p126
      $region26: #{pyramid_upsample.1} parent=11 // pred_check_branch
        %283 = sbr.rel (%p281) target = $region28
      $region27: #{pyramid_upsample.1} parent=11 // pred_region
        _
      $region28: #{pyramid_upsample.1} parent=11 // pred_fallthru
        _
      // Predicated region
      $region29: #{pyramid_upsample.1} parent=11 // pred_check
        %p284 = pneg %p147
      $region30: #{pyramid_upsample.1} parent=11 // pred_check_branch
        %286 = sbr.rel (%p284) target = $region32
      $region31: #{pyramid_upsample.1} parent=11 // pred_region
        _
      $region32: #{pyramid_upsample.1} parent=11 // pred_fallthru
        _
      // Predicated region
      $region33: #{pyramid_upsample.1} parent=11 // pred_check
        %p287 = pneg %p168
      $region34: #{pyramid_upsample.1} parent=11 // pred_check_branch
        %289 = sbr.rel (%p287) target = $region36
      $region35: #{pyramid_upsample.1} parent=11 // pred_region
        _
      $region36: #{pyramid_upsample.1} parent=11 // pred_fallthru
        _
      // Predicated region
      $region37: #{pyramid_upsample.1} parent=11 // pred_check
        %p290 = pneg %p189
      $region38: #{pyramid_upsample.1} parent=11 // pred_check_branch
        %292 = sbr.rel (%p290) target = $region40
      $region39: #{pyramid_upsample.1} parent=11 // pred_region
        _
      $region40: #{pyramid_upsample.1} parent=11 // pred_fallthru
        _
      // Predicated region
      $region41: #{pyramid_upsample.1} parent=11 // pred_check
        %p293 = pneg %p210
      $region42: #{pyramid_upsample.1} parent=11 // pred_check_branch
        %295 = sbr.rel (%p293) target = $region44
      $region43: #{pyramid_upsample.1} parent=11 // pred_region
        _
      $region44: #{pyramid_upsample.1} parent=11 // pred_fallthru
        _
      // Predicated region
      $region45: #{pyramid_upsample.1} parent=11 // pred_check
        %p296 = pneg %p231
      $region46: #{pyramid_upsample.1} parent=11 // pred_check_branch
        %298 = sbr.rel (%p296) target = $region48
      $region47: #{pyramid_upsample.1} parent=11 // pred_region
        _
      $region48: #{pyramid_upsample.1} parent=11 // pred_fallthru
        _
    $region12: #{pyramid_upsample.1} parent=5 // pred_fallthru
      _
    %p299 = scmp.lt.s32.totalorder %s16, 2
    // Predicated region
    $region49: #{pyramid_upsample.1} parent=5 // pred_check
      %p300 = pneg %p299
    $region50: #{pyramid_upsample.1} parent=5 // pred_check_branch
      %302 = sbr.rel (%p300) target = $region52
    $region51: #{pyramid_upsample.1} parent=5 // pred_region
      // Predicated region
      $region53: #{pyramid_upsample.1} parent=51 // pred_check
        %p303 = pneg %p36
      $region54: #{pyramid_upsample.1} parent=51 // pred_check_branch
        %305 = sbr.rel (%p303) target = $region56
      $region55: #{pyramid_upsample.1} parent=51 // pred_region
        %p306 = scmp.lt.s32.totalorder %s16, 1
        %s307 = scalar_select %p306, %s16, 1
        %s308 = smul.addr %s307, 2
        %s309 = smul.addr %s308, 8
        %s310 = scalar_lea.vmem %s0, %s309
      $region56: #{pyramid_upsample.1} parent=51 // pred_fallthru
        _
    $region52: #{pyramid_upsample.1} parent=5 // pred_fallthru
      _
    %p311 = scmp.le.s32.totalorder 1, %s16
    %p312 = scmp.lt.s32.totalorder %s16, 3
    %p313 = pnand %p311, %p312
    %p314 = pneg %p313
    // Predicated region
    $region57: #{pyramid_upsample.1} parent=5 // pred_check
      _
    $region58: #{pyramid_upsample.1} parent=5 // pred_check_branch
      %316 = sbr.rel (%p313) target = $region60
    $region59: #{pyramid_upsample.1} parent=5 // pred_region
      %s317 = ssub.s32 %s16, 1
      %p318 = scmp.lt.s32.totalorder %s21, 1
      %s319 = scalar_select %p318, %s21, 1
      %s320 = smul.addr %s319, 2
      %s321 = smul.addr %s320, 8
      %s322 = scalar_lea.vmem %s0, %s321
      %p323 = pneg %p42
      %p324 = pneg %p39
      %p325 = pneg %p63
      %p326 = pneg %p60
      %p327 = pneg %p84
      %p328 = pneg %p81
      %p329 = pneg %p105
      %p330 = pneg %p102
      %p331 = pneg %p126
      %p332 = pneg %p123
      %p333 = pneg %p147
      %p334 = pneg %p144
      %p335 = pneg %p168
      %p336 = pneg %p165
      %p337 = pneg %p189
      %p338 = pneg %p186
      %p339 = pneg %p210
      %p340 = pneg %p207
      %p341 = pneg %p231
      %p342 = pneg %p228
      %p343 = pneg %p257
      %p344 = pneg %p254
      %p345 = scmp.lt.s32.totalorder %s21, 1
      %s346 = scalar_select %p345, %s21, 1
      %s347 = smul.addr %s346, 8
      %s348 = smul.addr %s347, 8
      %s349 = scalar_lea.vmem %s10, %s348
      %p350 = scmp.lt.s32.totalorder %s21, 1
      %s351 = scalar_select %p350, %s21, 1
      %s352 = smul.addr %s351, 2
      %s353 = smul.addr %s352, 8
      %s354 = scalar_lea.vmem %s0, %s353
      %p355 = scmp.lt.s32.totalorder %s21, 1
      %s356 = scalar_select %p355, %s21, 1
      %s357 = smul.addr %s356, 8
      %s358 = smul.addr %s357, 8
      %s359 = scalar_lea.vmem %s10, %s358
      %v361 = vlaneseq
      %v362 = vshrl.u32 %v361, 7
      %v363 = vadd.s32 %v362, 8
      %v364 = vadd.s32 %v362, 4294967294
      %v365 = vadd.s32 %v363, 4294967294
      %vm366 = vcmp.ge.s32.totalorder %v364, 0
      %vm367 = vcmp.ge.s32.totalorder %v365, 0
      %vm368 = vcmp.lt.s32.totalorder %v364, 16
      %vm369 = vcmp.lt.s32.totalorder %v365, 16
      %vm370 = vmand %vm366, %vm368
      %vm371 = vmand %vm367, %vm369
      %v372 = vadd.s32 %v362, 4294967295
      %v373 = vadd.s32 %v363, 4294967295
      %vm374 = vcmp.ge.s32.totalorder %v372, 0
      %vm375 = vcmp.ge.s32.totalorder %v373, 0
      %vm376 = vcmp.lt.s32.totalorder %v372, 16
      %vm377 = vcmp.lt.s32.totalorder %v373, 16
      %vm378 = vmand %vm374, %vm376
      %vm379 = vmand %vm375, %vm377
      %v380 = vadd.s32 %v362, 1
      %v381 = vadd.s32 %v363, 1
      %vm382 = vcmp.ge.s32.totalorder %v380, 0
      %vm383 = vcmp.ge.s32.totalorder %v381, 0
      %vm384 = vcmp.lt.s32.totalorder %v380, 16
      %vm385 = vcmp.lt.s32.totalorder %v381, 16
      %vm386 = vmand %vm382, %vm384
      %vm387 = vmand %vm383, %vm385
      %v388 = vadd.s32 %v362, 2
      %v389 = vadd.s32 %v363, 2
      %vm390 = vcmp.ge.s32.totalorder %v388, 0
      %vm391 = vcmp.ge.s32.totalorder %v389, 0
      %vm392 = vcmp.lt.s32.totalorder %v388, 16
      %vm393 = vcmp.lt.s32.totalorder %v389, 16
      %vm394 = vmand %vm390, %vm392
      %vm395 = vmand %vm391, %vm393
      %v396 = vld [vmem:[%s354] sm:$0xff]
      %v397 = vld [vmem:[%s354 + $0x8] sm:$0xff]
      %v398 = vld [vmem:[%s1] sm:$0xff]
      %v399 = vld [vmem:[%s1 + $0x8] sm:$0xf]
      %v400 = vld [vmem:[%s1 + $0xc] sm:$0xff]
      %v401 = vld [vmem:[%s1 + $0x14] sm:$0xf]
      %v402 = vld [vmem:[%s1 + $0x18] sm:$0xff]
      %v403 = vld [vmem:[%s1 + $0x20] sm:$0xf]
      %v404 = vld [vmem:[%s1 + $0x24] sm:$0xff]
      %v405 = vld [vmem:[%s1 + $0x2c] sm:$0xf]
      %v406 = vld [vmem:[%s1 + $0x30] sm:$0xff]
      %v407 = vld [vmem:[%s1 + $0x38] sm:$0xf]
      %v408 = vld [vmem:[%s1 + $0x3c] sm:$0xff]
      %v409 = vld [vmem:[%s1 + $0x44] sm:$0xf]
      %v410 = vld [vmem:[%s1 + $0x48] sm:$0xff]
      %v411 = vld [vmem:[%s1 + $0x50] sm:$0xf]
      %v412 = vld [vmem:[%s1 + $0x54] sm:$0xff]
      %v413 = vld [vmem:[%s1 + $0x5c] sm:$0xf]
      %v414 = vpack.c.bf16 %v397, %v396
      %v431 = vunpack.c.l.b16 %v398
      %v432 = vunpack.c.h.b16 %v398
      %v433 = vunpack.c.l.b16 %v399
      %v434 = vunpack.c.l.b16 %v400
      %v435 = vunpack.c.h.b16 %v400
      %v436 = vunpack.c.l.b16 %v401
      %v437 = vunpack.c.l.b16 %v402
      %v438 = vunpack.c.h.b16 %v402
      %v439 = vunpack.c.l.b16 %v403
      %v440 = vunpack.c.l.b16 %v404
      %v441 = vunpack.c.h.b16 %v404
      %v442 = vunpack.c.l.b16 %v405
      %v443 = vunpack.c.l.b16 %v406
      %v444 = vunpack.c.h.b16 %v406
      %v445 = vunpack.c.l.b16 %v407
      %v446 = vunpack.c.l.b16 %v408
      %v447 = vunpack.c.h.b16 %v408
      %v448 = vunpack.c.l.b16 %v409
      %v449 = vunpack.c.l.b16 %v410
      %v450 = vunpack.c.h.b16 %v410
      %v451 = vunpack.c.l.b16 %v411
      %v452 = vunpack.c.l.b16 %v412
      %v453 = vunpack.c.h.b16 %v412
      %v454 = vunpack.c.l.b16 %v413
      %v455 = vpack.c.b16 %v434, %v431
      %v456 = vpack.c.b16 %v435, %v432
      %v457 = vpack.c.b16 %v436, %v433
      %v458 = vpack.c.b16 %v440, %v437
      %v459 = vpack.c.b16 %v441, %v438
      %v460 = vpack.c.b16 %v442, %v439
      %v461 = vpack.c.b16 %v446, %v443
      %v462 = vpack.c.b16 %v447, %v444
      %v463 = vpack.c.b16 %v448, %v445
      %v464 = vpack.c.b16 %v452, %v449
      %v465 = vpack.c.b16 %v453, %v450
      %v466 = vpack.c.b16 %v454, %v451
      %vm479 = vcmask 523264
      %v481 = vsel %vm479, %v414, 0
      %483 = vmatpush.bf16.msra.mxu0 0
      %484 = vmatpush.bf16.msra.mxu0 0
      %485 = vmatpush.bf16.msra.mxu0 0
      %486 = vmatpush.bf16.msra.mxu0 0
      %487 = vmatpush.bf16.msra.mxu0 %v464
      %488 = vmatpush.bf16.msra.mxu0 %v461
      %489 = vmatpush.bf16.msra.mxu0 %v458
      %490 = vmatpush.bf16.msra.mxu0 %v455
      %491 = vmatmul.bf16.gmra.mxu0 %v481
      %v492 = vpop.f32.mrf.mxu0
      %v493 = vadd.f32 0.0, %v492
      %v494 = vpop.f32.mrf.mxu0
      %v495 = vadd.f32 0.0, %v494
      %496 = vdwg.mxu0
      %497 = vmatpush.bf16.msra.mxu0 0
      %498 = vmatpush.bf16.msra.mxu0 0
      %499 = vmatpush.bf16.msra.mxu0 0
      %500 = vmatpush.bf16.msra.mxu0 0
      %501 = vmatpush.bf16.msra.mxu0 %v465
      %502 = vmatpush.bf16.msra.mxu0 %v462
      %503 = vmatpush.bf16.msra.mxu0 %v459
      %504 = vmatpush.bf16.msra.mxu0 %v456
      %505 = vmatmul.bf16.gmra.mxu0 %v481
      %v506 = vpop.f32.mrf.mxu0
      %v507 = vadd.f32 0.0, %v506
      %v508 = vpop.f32.mrf.mxu0
      %v509 = vadd.f32 0.0, %v508
      %510 = vdwg.mxu0
      %511 = vmatpush.bf16.msra.mxu0 0
      %512 = vmatpush.bf16.msra.mxu0 0
      %513 = vmatpush.bf16.msra.mxu0 0
      %514 = vmatpush.bf16.msra.mxu0 0
      %515 = vmatpush.bf16.msra.mxu0 %v466
      %516 = vmatpush.bf16.msra.mxu0 %v463
      %517 = vmatpush.bf16.msra.mxu0 %v460
      %518 = vmatpush.bf16.msra.mxu0 %v457
      %519 = vmatmul.bf16.gmra.mxu0 %v481
      %v520 = vpop.f32.mrf.mxu0
      %v521 = vadd.f32 0.0, %v520
      %v522 = vpop.f32.mrf.mxu0
      %v523 = vadd.f32 0.0, %v522
      %524 = vdwg.mxu0
      %v525 = vld [vmem:[%s9] sm:$0x1]
      %v526 = vperm.slane %v525, 0
      %v527 = vadd.f32 %v493, %v526
      %v528 = vadd.f32 %v495, %v526
      %v529 = vld [vmem:[%s9 + $0x1] sm:$0x1]
      %v530 = vperm.slane %v529, 0
      %v531 = vadd.f32 %v507, %v530
      %v532 = vadd.f32 %v509, %v530
      %v533 = vld [vmem:[%s2] sm:$0xff]
      %v534 = vld [vmem:[%s2 + $0x8] sm:$0xff]
      %v535 = vpack.c.bf16 %v534, %v533
      %v536 = vpack.c.bf16 %v523, %v521
      %v537 = vld [vmem:[%s9 + $0x5] sm:$0x1]
      %v538 = vperm.slane %v537, 0
      %vm539 = vcmask 130048
      %v541 = vsel %vm539, %v535, 0
      %543 = vmatpush.bf16.msra.mxu0 0
      %544 = vmatpush.bf16.msra.mxu0 0
      %545 = vmatpush.bf16.msra.mxu0 0
      %546 = vmatpush.bf16.msra.mxu0 0
      %547 = vmatpush.bf16.msra.mxu0 0
      %548 = vmatpush.bf16.msra.mxu0 0
      %549 = vmatpush.bf16.msra.mxu0 0
      %550 = vmatpush.bf16.msra.mxu0 %v536
      %551 = vmatmul.bf16.gmra.mxu0 %v541
      %v552 = vpop.f32.mrf.mxu0
      %v553 = vadd.f32 %v538, %v552
      %v554 = vpop.f32.mrf.mxu0
      %v555 = vadd.f32 %v538, %v554
      %556 = vdwg.mxu0
      %v557 = vrot.slane %v531, 7
      %v558 = vrot.slane %v532, 7
      %vm559 = vcmp.lt.s32.totalorder %v362, 1
      %v560 = vsel %vm559, %v557, %v558
      %v561 = vsel %vm559, %v558, %v557
      %v562 = vsel %vm378, %v561, 0.0
      %v563 = vsel %vm379, %v560, 0.0
      %v564 = vrot.slane %v531, 1
      %v565 = vrot.slane %v532, 1
      %vm566 = vcmp.lt.s32.totalorder %v362, 7
      %v567 = vsel %vm566, %v564, %v565
      %v568 = vsel %vm566, %v565, %v564
      %v569 = vsel %vm386, %v567, 0.0
      %v570 = vsel %vm387, %v568, 0.0
      %571 = vrot.lane.b32.xlu0 %v562, 8
      %v572 = vpop.permute.xlu0 %571
      %573 = vrot.lane.b32.xlu0 %v563, 8
      %v574 = vpop.permute.xlu0 %573
      %v575 = vld [vmem:[%s8] sm:$0x1]
      %v576 = vperm.slane %v575, 0
      %v577 = vmul.f32 %v572, %v576
      %v578 = vmul.f32 %v574, %v576
      %v579 = vld [vmem:[%s8 + $0x1] sm:$0x1]
      %v580 = vperm.slane %v579, 0
      %v581 = vmul.f32 %v562, %v580
      %v582 = vmul.f32 %v563, %v580
      %v583 = vadd.f32 %v577, %v581
      %v584 = vadd.f32 %v578, %v582
      %585 = vrot.lane.b32.xlu0 %v562, 120
      %v586 = vpop.permute.xlu0 %585
      %587 = vrot.lane.b32.xlu0 %v563, 120
      %v588 = vpop.permute.xlu0 %587
      %v589 = vld [vmem:[%s8 + $0x2] sm:$0x1]
      %v590 = vperm.slane %v589, 0
      %v591 = vmul.f32 %v586, %v590
      %v592 = vmul.f32 %v588, %v590
      %v593 = vadd.f32 %v583, %v591
      %v594 = vadd.f32 %v584, %v592
      %595 = vrot.lane.b32.xlu0 %v531, 8
      %v596 = vpop.permute.xlu0 %595
      %597 = vrot.lane.b32.xlu0 %v532, 8
      %v598 = vpop.permute.xlu0 %597
      %v599 = vld [vmem:[%s8 + $0x3] sm:$0x1]
      %v600 = vperm.slane %v599, 0
      %v601 = vmul.f32 %v596, %v600
      %v602 = vmul.f32 %v598, %v600
      %v603 = vadd.f32 %v593, %v601
      %v604 = vadd.f32 %v594, %v602
      %v605 = vld [vmem:[%s8 + $0x4] sm:$0x1]
      %v606 = vperm.slane %v605, 0
      %v607 = vmul.f32 %v531, %v606
      %v608 = vmul.f32 %v532, %v606
      %v609 = vadd.f32 %v603, %v607
      %v610 = vadd.f32 %v604, %v608
      %611 = vrot.lane.b32.xlu0 %v531, 120
      %v612 = vpop.permute.xlu0 %611
      %613 = vrot.lane.b32.xlu0 %v532, 120
      %v614 = vpop.permute.xlu0 %613
      %v615 = vld [vmem:[%s8 + $0x5] sm:$0x1]
      %v616 = vperm.slane %v615, 0
      %v617 = vmul.f32 %v612, %v616
      %v618 = vmul.f32 %v614, %v616
      %v619 = vadd.f32 %v609, %v617
      %v620 = vadd.f32 %v610, %v618
      %621 = vrot.lane.b32.xlu0 %v569, 8
      %v622 = vpop.permute.xlu0 %621
      %623 = vrot.lane.b32.xlu0 %v570, 8
      %v624 = vpop.permute.xlu0 %623
      %v625 = vld [vmem:[%s8 + $0x6] sm:$0x1]
      %v626 = vperm.slane %v625, 0
      %v627 = vmul.f32 %v622, %v626
      %v628 = vmul.f32 %v624, %v626
      %v629 = vadd.f32 %v619, %v627
      %v630 = vadd.f32 %v620, %v628
      %v631 = vld [vmem:[%s8 + $0x7] sm:$0x1]
      %v632 = vperm.slane %v631, 0
      %v633 = vmul.f32 %v569, %v632
      %v634 = vmul.f32 %v570, %v632
      %v635 = vadd.f32 %v629, %v633
      %v636 = vadd.f32 %v630, %v634
      %637 = vrot.lane.b32.xlu0 %v569, 120
      %v638 = vpop.permute.xlu0 %637
      %639 = vrot.lane.b32.xlu0 %v570, 120
      %v640 = vpop.permute.xlu0 %639
      %v641 = vld [vmem:[%s8 + $0x8] sm:$0x1]
      %v642 = vperm.slane %v641, 0
      %v643 = vmul.f32 %v638, %v642
      %v644 = vmul.f32 %v640, %v642
      %v645 = vadd.f32 %v635, %v643
      %v646 = vadd.f32 %v636, %v644
      %v647 = vld [vmem:[%s9 + $0x2] sm:$0x1]
      %v648 = vperm.slane %v647, 0
      %v649 = vadd.f32 %v645, %v648
      %v650 = vadd.f32 %v646, %v648
      %v651 = vmax.f32 %v649, 0.0
      %v652 = vmax.f32 %v650, 0.0
      %v653 = vld [vmem:[%s5] sm:$0xf]
      %v654 = vld [vmem:[%s5 + $0x4] sm:$0xf]
      %v655 = vld [vmem:[%s5 + $0x8] sm:$0xf]
      %v656 = vld [vmem:[%s5 + $0xc] sm:$0xf]
      %v657 = vld [vmem:[%s5 + $0x10] sm:$0xf]
      %v658 = vld [vmem:[%s5 + $0x14] sm:$0xf]
      %v659 = vld [vmem:[%s5 + $0x18] sm:$0xf]
      %v660 = vld [vmem:[%s5 + $0x1c] sm:$0xf]
      %v661 = vld [vmem:[%s5 + $0x20] sm:$0xf]
      %v662 = vld [vmem:[%s5 + $0x24] sm:$0xf]
      %v663 = vld [vmem:[%s5 + $0x28] sm:$0xf]
      %v664 = vld [vmem:[%s5 + $0x2c] sm:$0xf]
      %v665 = vld [vmem:[%s5 + $0x30] sm:$0xf]
      %v666 = vld [vmem:[%s5 + $0x34] sm:$0xf]
      %v667 = vld [vmem:[%s5 + $0x38] sm:$0xf]
      %v668 = vld [vmem:[%s5 + $0x3c] sm:$0xf]
      %v669 = vpack.c.bf16 %v652, %v651
      %v670 = vld [vmem:[%s9 + $0x3] sm:$0x1]
      %v671 = vperm.slane %v670, 0
      %v688 = vunpack.c.l.b16 %v653
      %v689 = vunpack.c.l.b16 %v654
      %v690 = vunpack.c.l.b16 %v655
      %v691 = vunpack.c.l.b16 %v656
      %v692 = vunpack.c.l.b16 %v657
      %v693 = vunpack.c.l.b16 %v658
      %v694 = vunpack.c.l.b16 %v659
      %v695 = vunpack.c.l.b16 %v660
      %v696 = vunpack.c.l.b16 %v661
      %v697 = vunpack.c.l.b16 %v662
      %v698 = vunpack.c.l.b16 %v663
      %v699 = vunpack.c.l.b16 %v664
      %v700 = vunpack.c.l.b16 %v665
      %v701 = vunpack.c.l.b16 %v666
      %v702 = vunpack.c.l.b16 %v667
      %v703 = vunpack.c.l.b16 %v668
      %v704 = vpack.c.b16 %v689, %v688
      %v705 = vpack.c.b16 %v691, %v690
      %v706 = vpack.c.b16 %v693, %v692
      %v707 = vpack.c.b16 %v695, %v694
      %v708 = vpack.c.b16 %v697, %v696
      %v709 = vpack.c.b16 %v699, %v698
      %v710 = vpack.c.b16 %v701, %v700
      %v711 = vpack.c.b16 %v703, %v702
      %720 = vmatpush.bf16.msra.mxu0 %v711
      %721 = vmatpush.bf16.msra.mxu0 %v710
      %722 = vmatpush.bf16.msra.mxu0 %v709
      %723 = vmatpush.bf16.msra.mxu0 %v708
      %724 = vmatpush.bf16.msra.mxu0 %v707
      %725 = vmatpush.bf16.msra.mxu0 %v706
      %726 = vmatpush.bf16.msra.mxu0 %v705
      %727 = vmatpush.bf16.msra.mxu0 %v704
      %728 = vmatmul.bf16.gmra.mxu0 %v669
      %v729 = vpop.f32.mrf.mxu0
      %v730 = vadd.f32 %v671, %v729
      %v731 = vpop.f32.mrf.mxu0
      %v732 = vadd.f32 %v671, %v731
      %733 = vdwg.mxu0
      %v734 = vmax.f32 %v730, 0.0
      %v735 = vmax.f32 %v732, 0.0
      %v736 = vld [vmem:[%s3] sm:$0xff]
      %v737 = vld [vmem:[%s3 + $0x8] sm:$0xff]
      %v738 = vld [vmem:[%s3 + $0x10] sm:$0xff]
      %v739 = vld [vmem:[%s3 + $0x18] sm:$0xff]
      %v740 = vpack.c.bf16 %v737, %v736
      %v741 = vpack.c.bf16 %v739, %v738
      %v742 = vpack.c.bf16 %v735, %v734
      %v744 = vsel %vm539, %v740, 0
      %v747 = vsel %vm539, %v741, 0
      %749 = vmatpush.bf16.msra.mxu0 0
      %750 = vmatpush.bf16.msra.mxu0 0
      %751 = vmatpush.bf16.msra.mxu0 0
      %752 = vmatpush.bf16.msra.mxu0 0
      %753 = vmatpush.bf16.msra.mxu0 0
      %754 = vmatpush.bf16.msra.mxu0 0
      %755 = vmatpush.bf16.msra.mxu0 0
      %756 = vmatpush.bf16.msra.mxu0 %v742
      %757 = vmatmul.bf16.gmra.mxu0 %v744
      %v758 = vpop.f32.mrf.mxu0
      %v759 = vadd.f32 0.0, %v758
      %v760 = vpop.f32.mrf.mxu0
      %v761 = vadd.f32 0.0, %v760
      %762 = vmatmul.bf16.gmra.mxu0 %v747
      %v763 = vpop.f32.mrf.mxu0
      %v764 = vadd.f32 0.0, %v763
      %v765 = vpop.f32.mrf.mxu0
      %v766 = vadd.f32 0.0, %v765
      %767 = vdwg.mxu0
      %v768 = vld [vmem:[%s4] sm:$0xff]
      %v769 = vld [vmem:[%s4 + $0x8] sm:$0xff]
      %v770 = vld [vmem:[%s4 + $0x10] sm:$0xff]
      %v771 = vld [vmem:[%s4 + $0x18] sm:$0xff]
      %v772 = vld [vmem:[%s4 + $0x20] sm:$0xff]
      %v773 = vld [vmem:[%s4 + $0x28] sm:$0xff]
      %v774 = vld [vmem:[%s4 + $0x30] sm:$0xff]
      %v775 = vld [vmem:[%s4 + $0x38] sm:$0xff]
      %v776 = vld [vmem:[%s4 + $0x40] sm:$0xff]
      %v777 = vld [vmem:[%s4 + $0x48] sm:$0xff]
      %v778 = vld [vmem:[%s4 + $0x50] sm:$0xff]
      %v779 = vld [vmem:[%s4 + $0x58] sm:$0xff]
      %v780 = vld [vmem:[%s4 + $0x60] sm:$0xff]
      %v781 = vld [vmem:[%s4 + $0x68] sm:$0xff]
      %v782 = vld [vmem:[%s4 + $0x70] sm:$0xff]
      %v783 = vld [vmem:[%s4 + $0x78] sm:$0xff]
      %v784 = vpack.c.bf16 %v761, %v759
      %v785 = vpack.c.bf16 %v766, %v764
      %v802 = vunpack.c.l.b16 %v768
      %v803 = vunpack.c.h.b16 %v768
      %v804 = vunpack.c.l.b16 %v769
      %v805 = vunpack.c.h.b16 %v769
      %v806 = vunpack.c.l.b16 %v770
      %v807 = vunpack.c.h.b16 %v770
      %v808 = vunpack.c.l.b16 %v771
      %v809 = vunpack.c.h.b16 %v771
      %v810 = vunpack.c.l.b16 %v772
      %v811 = vunpack.c.h.b16 %v772
      %v812 = vunpack.c.l.b16 %v773
      %v813 = vunpack.c.h.b16 %v773
      %v814 = vunpack.c.l.b16 %v774
      %v815 = vunpack.c.h.b16 %v774
      %v816 = vunpack.c.l.b16 %v775
      %v817 = vunpack.c.h.b16 %v775
      %v818 = vunpack.c.l.b16 %v776
      %v819 = vunpack.c.h.b16 %v776
      %v820 = vunpack.c.l.b16 %v777
      %v821 = vunpack.c.h.b16 %v777
      %v822 = vunpack.c.l.b16 %v778
      %v823 = vunpack.c.h.b16 %v778
      %v824 = vunpack.c.l.b16 %v779
      %v825 = vunpack.c.h.b16 %v779
      %v826 = vunpack.c.l.b16 %v780
      %v827 = vunpack.c.h.b16 %v780
      %v828 = vunpack.c.l.b16 %v781
      %v829 = vunpack.c.h.b16 %v781
      %v830 = vunpack.c.l.b16 %v782
      %v831 = vunpack.c.h.b16 %v782
      %v832 = vunpack.c.l.b16 %v783
      %v833 = vunpack.c.h.b16 %v783
      %v834 = vpack.c.b16 %v804, %v802
      %v835 = vpack.c.b16 %v805, %v803
      %v836 = vpack.c.b16 %v808, %v806
      %v837 = vpack.c.b16 %v809, %v807
      %v838 = vpack.c.b16 %v812, %v810
      %v839 = vpack.c.b16 %v813, %v811
      %v840 = vpack.c.b16 %v816, %v814
      %v841 = vpack.c.b16 %v817, %v815
      %v842 = vpack.c.b16 %v820, %v818
      %v843 = vpack.c.b16 %v821, %v819
      %v844 = vpack.c.b16 %v824, %v822
      %v845 = vpack.c.b16 %v825, %v823
      %v846 = vpack.c.b16 %v828, %v826
      %v847 = vpack.c.b16 %v829, %v827
      %v848 = vpack.c.b16 %v832, %v830
      %v849 = vpack.c.b16 %v833, %v831
      %866 = vmatpush.bf16.msra.mxu0 %v848
      %867 = vmatpush.bf16.msra.mxu0 %v846
      %868 = vmatpush.bf16.msra.mxu0 %v844
      %869 = vmatpush.bf16.msra.mxu0 %v842
      %870 = vmatpush.bf16.msra.mxu0 %v840
      %871 = vmatpush.bf16.msra.mxu0 %v838
      %872 = vmatpush.bf16.msra.mxu0 %v836
      %873 = vmatpush.bf16.msra.mxu0 %v834
      %874 = vmatmul.bf16.gmra.mxu0 %v784
      %v875 = vpop.f32.mrf.mxu0
      %v876 = vadd.f32 0.0, %v875
      %v877 = vpop.f32.mrf.mxu0
      %v878 = vadd.f32 0.0, %v877
      %879 = vmatmul.bf16.gmra.mxu0 %v785
      %v880 = vpop.f32.mrf.mxu0
      %v881 = vadd.f32 0.0, %v880
      %v882 = vpop.f32.mrf.mxu0
      %v883 = vadd.f32 0.0, %v882
      %884 = vdwg.mxu0
      %885 = vmatpush.bf16.msra.mxu0 %v849
      %886 = vmatpush.bf16.msra.mxu0 %v847
      %887 = vmatpush.bf16.msra.mxu0 %v845
      %888 = vmatpush.bf16.msra.mxu0 %v843
      %889 = vmatpush.bf16.msra.mxu0 %v841
      %890 = vmatpush.bf16.msra.mxu0 %v839
      %891 = vmatpush.bf16.msra.mxu0 %v837
      %892 = vmatpush.bf16.msra.mxu0 %v835
      %893 = vmatmul.bf16.gmra.mxu0 %v784
      %v894 = vpop.f32.mrf.mxu0
      %v895 = vadd.f32 0.0, %v894
      %v896 = vpop.f32.mrf.mxu0
      %v897 = vadd.f32 0.0, %v896
      %898 = vmatmul.bf16.gmra.mxu0 %v785
      %v899 = vpop.f32.mrf.mxu0
      %v900 = vadd.f32 0.0, %v899
      %v901 = vpop.f32.mrf.mxu0
      %v902 = vadd.f32 0.0, %v901
      %903 = vdwg.mxu0
      %904 = vrot.lane.b32.xlu0 %v527, 112
      %v905 = vpop.permute.xlu0 %904
      %906 = vrot.lane.b32.xlu0 %v528, 112
      %v907 = vpop.permute.xlu0 %906
      %908 = vrot.lane.b32.xlu0 %v527, 120
      %v909 = vpop.permute.xlu0 %908
      %910 = vrot.lane.b32.xlu0 %v528, 120
      %v911 = vpop.permute.xlu0 %910
      %912 = vrot.lane.b32.xlu0 %v527, 8
      %v913 = vpop.permute.xlu0 %912
      %914 = vrot.lane.b32.xlu0 %v528, 8
      %v915 = vpop.permute.xlu0 %914
      %916 = vrot.lane.b32.xlu0 %v527, 16
      %v917 = vpop.permute.xlu0 %916
      %918 = vrot.lane.b32.xlu0 %v528, 16
      %v919 = vpop.permute.xlu0 %918
      %v920 = vld [vmem:[%s7] sm:$0x1]
      %v921 = vperm.slane %v920, 0
      %v922 = vmul.f32 %v905, %v921
      %v923 = vmul.f32 %v907, %v921
      %v924 = vld [vmem:[%s7 + $0x2] sm:$0x1]
      %v925 = vperm.slane %v924, 0
      %v926 = vmul.f32 %v913, %v925
      %v927 = vmul.f32 %v915, %v925
      %v928 = vadd.f32 %v922, %v926
      %v929 = vadd.f32 %v923, %v927
      %v930 = vrot.slane %v928, 2
      %v931 = vrot.slane %v929, 2
      %vm932 = vcmp.lt.s32.totalorder %v362, 6
      %v933 = vsel %vm932, %v930, %v931
      %v934 = vsel %vm932, %v931, %v930
      %v935 = vsel %vm394, %v933, 0.0
      %v936 = vsel %vm395, %v934, 0.0
      %v937 = vld [vmem:[%s7 + $0x8] sm:$0x1]
      %v938 = vperm.slane %v937, 0
      %v939 = vmul.f32 %v905, %v938
      %v940 = vmul.f32 %v907, %v938
      %v941 = vld [vmem:[%s7 + $0xa] sm:$0x1]
      %v942 = vperm.slane %v941, 0
      %v943 = vmul.f32 %v913, %v942
      %v944 = vmul.f32 %v915, %v942
      %v945 = vadd.f32 %v939, %v943
      %v946 = vadd.f32 %v940, %v944
      %v947 = vrot.slane %v945, 7
      %v948 = vrot.slane %v946, 7
      %v949 = vsel %vm559, %v947, %v948
      %v950 = vsel %vm559, %v948, %v947
      %v951 = vsel %vm378, %v950, 0.0
      %v952 = vsel %vm379, %v949, 0.0
      %v953 = vadd.f32 %v935, %v951
      %v954 = vadd.f32 %v936, %v952
      %v955 = vld [vmem:[%s7 + $0x1] sm:$0x1]
      %v956 = vperm.slane %v955, 0
      %v957 = vmul.f32 %v909, %v956
      %v958 = vmul.f32 %v911, %v956
      %v959 = vld [vmem:[%s7 + $0x3] sm:$0x1]
      %v960 = vperm.slane %v959, 0
      %v961 = vmul.f32 %v917, %v960
      %v962 = vmul.f32 %v919, %v960
      %v963 = vadd.f32 %v957, %v961
      %v964 = vadd.f32 %v958, %v962
      %v965 = vrot.slane %v963, 2
      %v966 = vrot.slane %v964, 2
      %v967 = vsel %vm932, %v965, %v966
      %v968 = vsel %vm932, %v966, %v965
      %v969 = vsel %vm394, %v967, 0.0
      %v970 = vsel %vm395, %v968, 0.0
      %v971 = vld [vmem:[%s7 + $0x9] sm:$0x1]
      %v972 = vperm.slane %v971, 0
      %v973 = vmul.f32 %v909, %v972
      %v974 = vmul.f32 %v911, %v972
      %v975 = vld [vmem:[%s7 + $0xb] sm:$0x1]
      %v976 = vperm.slane %v975, 0
      %v977 = vmul.f32 %v917, %v976
      %v978 = vmul.f32 %v919, %v976
      %v979 = vadd.f32 %v973, %v977
      %v980 = vadd.f32 %v974, %v978
      %v981 = vrot.slane %v979, 7
      %v982 = vrot.slane %v980, 7
      %v983 = vsel %vm559, %v981, %v982
      %v984 = vsel %vm559, %v982, %v981
      %v985 = vsel %vm378, %v984, 0.0
      %v986 = vsel %vm379, %v983, 0.0
      %v987 = vadd.f32 %v969, %v985
      %v988 = vadd.f32 %v970, %v986
      %v989 = vld [vmem:[%s7 + $0x4] sm:$0x1]
      %v990 = vperm.slane %v989, 0
      %v991 = vmul.f32 %v905, %v990
      %v992 = vmul.f32 %v907, %v990
      %v993 = vld [vmem:[%s7 + $0x6] sm:$0x1]
      %v994 = vperm.slane %v993, 0
      %v995 = vmul.f32 %v913, %v994
      %v996 = vmul.f32 %v915, %v994
      %v997 = vadd.f32 %v991, %v995
      %v998 = vadd.f32 %v992, %v996
      %v999 = vrot.slane %v997, 1
      %v1000 = vrot.slane %v998, 1
      %v1001 = vsel %vm566, %v999, %v1000
      %v1002 = vsel %vm566, %v1000, %v999
      %v1003 = vsel %vm386, %v1001, 0.0
      %v1004 = vsel %vm387, %v1002, 0.0
      %v1005 = vld [vmem:[%s7 + $0xc] sm:$0x1]
      %v1006 = vperm.slane %v1005, 0
      %v1007 = vmul.f32 %v905, %v1006
      %v1008 = vmul.f32 %v907, %v1006
      %v1009 = vld [vmem:[%s7 + $0xe] sm:$0x1]
      %v1010 = vperm.slane %v1009, 0
      %v1011 = vmul.f32 %v913, %v1010
      %v1012 = vmul.f32 %v915, %v1010
      %v1013 = vadd.f32 %v1007, %v1011
      %v1014 = vadd.f32 %v1008, %v1012
      %v1015 = vrot.slane %v1013, 6
      %v1016 = vrot.slane %v1014, 6
      %vm1017 = vcmp.lt.s32.totalorder %v362, 2
      %v1018 = vsel %vm1017, %v1015, %v1016
      %v1019 = vsel %vm1017, %v1016, %v1015
      %v1020 = vsel %vm370, %v1019, 0.0
      %v1021 = vsel %vm371, %v1018, 0.0
      %v1022 = vadd.f32 %v1003, %v1020
      %v1023 = vadd.f32 %v1004, %v1021
      %v1024 = vld [vmem:[%s7 + $0x5] sm:$0x1]
      %v1025 = vperm.slane %v1024, 0
      %v1026 = vmul.f32 %v909, %v1025
      %v1027 = vmul.f32 %v911, %v1025
      %v1028 = vld [vmem:[%s7 + $0x7] sm:$0x1]
      %v1029 = vperm.slane %v1028, 0
      %v1030 = vmul.f32 %v917, %v1029
      %v1031 = vmul.f32 %v919, %v1029
      %v1032 = vadd.f32 %v1026, %v1030
      %v1033 = vadd.f32 %v1027, %v1031
      %v1034 = vrot.slane %v1032, 1
      %v1035 = vrot.slane %v1033, 1
      %v1036 = vsel %vm566, %v1034, %v1035
      %v1037 = vsel %vm566, %v1035, %v1034
      %v1038 = vsel %vm386, %v1036, 0.0
      %v1039 = vsel %vm387, %v1037, 0.0
      %v1040 = vld [vmem:[%s7 + $0xd] sm:$0x1]
      %v1041 = vperm.slane %v1040, 0
      %v1042 = vmul.f32 %v909, %v1041
      %v1043 = vmul.f32 %v911, %v1041
      %v1044 = vld [vmem:[%s7 + $0xf] sm:$0x1]
      %v1045 = vperm.slane %v1044, 0
      %v1046 = vmul.f32 %v917, %v1045
      %v1047 = vmul.f32 %v919, %v1045
      %v1048 = vadd.f32 %v1042, %v1046
      %v1049 = vadd.f32 %v1043, %v1047
      %v1050 = vrot.slane %v1048, 6
      %v1051 = vrot.slane %v1049, 6
      %v1052 = vsel %vm1017, %v1050, %v1051
      %v1053 = vsel %vm1017, %v1051, %v1050
      %v1054 = vsel %vm370, %v1053, 0.0
      %v1055 = vsel %vm371, %v1052, 0.0
      %v1056 = vadd.f32 %v1038, %v1054
      %v1057 = vadd.f32 %v1039, %v1055
      %v1058 = vld [vmem:[%s6] sm:$0xf]
      %v1059 = vld [vmem:[%s6 + $0x4] sm:$0xf]
      %v1060 = vld [vmem:[%s6 + $0x8] sm:$0xf]
      %v1061 = vld [vmem:[%s6 + $0xc] sm:$0xf]
      %v1062 = vld [vmem:[%s6 + $0x10] sm:$0xf]
      %v1063 = vld [vmem:[%s6 + $0x14] sm:$0xf]
      %v1064 = vld [vmem:[%s6 + $0x18] sm:$0xf]
      %v1065 = vld [vmem:[%s6 + $0x1c] sm:$0xf]
      %v1066 = vld [vmem:[%s6 + $0x20] sm:$0xf]
      %v1067 = vld [vmem:[%s6 + $0x24] sm:$0xf]
      %v1068 = vld [vmem:[%s6 + $0x28] sm:$0xf]
      %v1069 = vld [vmem:[%s6 + $0x2c] sm:$0xf]
      %v1070 = vld [vmem:[%s6 + $0x30] sm:$0xf]
      %v1071 = vld [vmem:[%s6 + $0x34] sm:$0xf]
      %v1072 = vld [vmem:[%s6 + $0x38] sm:$0xf]
      %v1073 = vld [vmem:[%s6 + $0x3c] sm:$0xf]
      %v1074 = vpack.c.bf16 %v954, %v953
      %v1075 = vpack.c.bf16 %v988, %v987
      %v1076 = vpack.c.bf16 %v1023, %v1022
      %v1077 = vpack.c.bf16 %v1057, %v1056
      %v1078 = vld [vmem:[%s9 + $0x4] sm:$0x1]
      %v1079 = vperm.slane %v1078, 0
      %v1096 = vunpack.c.l.b16 %v1058
      %v1097 = vunpack.c.l.b16 %v1059
      %v1098 = vunpack.c.l.b16 %v1060
      %v1099 = vunpack.c.l.b16 %v1061
      %v1100 = vunpack.c.l.b16 %v1062
      %v1101 = vunpack.c.l.b16 %v1063
      %v1102 = vunpack.c.l.b16 %v1064
      %v1103 = vunpack.c.l.b16 %v1065
      %v1104 = vunpack.c.l.b16 %v1066
      %v1105 = vunpack.c.l.b16 %v1067
      %v1106 = vunpack.c.l.b16 %v1068
      %v1107 = vunpack.c.l.b16 %v1069
      %v1108 = vunpack.c.l.b16 %v1070
      %v1109 = vunpack.c.l.b16 %v1071
      %v1110 = vunpack.c.l.b16 %v1072
      %v1111 = vunpack.c.l.b16 %v1073
      %v1112 = vpack.c.b16 %v1097, %v1096
      %v1113 = vpack.c.b16 %v1099, %v1098
      %v1114 = vpack.c.b16 %v1101, %v1100
      %v1115 = vpack.c.b16 %v1103, %v1102
      %v1116 = vpack.c.b16 %v1105, %v1104
      %v1117 = vpack.c.b16 %v1107, %v1106
      %v1118 = vpack.c.b16 %v1109, %v1108
      %v1119 = vpack.c.b16 %v1111, %v1110
      %1128 = vmatpush.bf16.msra.mxu0 %v1119
      %1129 = vmatpush.bf16.msra.mxu0 %v1118
      %1130 = vmatpush.bf16.msra.mxu0 %v1117
      %1131 = vmatpush.bf16.msra.mxu0 %v1116
      %1132 = vmatpush.bf16.msra.mxu0 %v1115
      %1133 = vmatpush.bf16.msra.mxu0 %v1114
      %1134 = vmatpush.bf16.msra.mxu0 %v1113
      %1135 = vmatpush.bf16.msra.mxu0 %v1112
      %1136 = vmatmul.bf16.gmra.mxu0 %v1074
      %v1137 = vpop.f32.mrf.mxu0
      %v1138 = vadd.f32 %v1079, %v1137
      %v1139 = vpop.f32.mrf.mxu0
      %v1140 = vadd.f32 %v1079, %v1139
      %1141 = vmatmul.bf16.gmra.mxu0 %v1075
      %v1142 = vpop.f32.mrf.mxu0
      %v1143 = vadd.f32 %v1079, %v1142
      %v1144 = vpop.f32.mrf.mxu0
      %v1145 = vadd.f32 %v1079, %v1144
      %1146 = vmatmul.bf16.gmra.mxu0 %v1076
      %v1147 = vpop.f32.mrf.mxu0
      %v1148 = vadd.f32 %v1079, %v1147
      %v1149 = vpop.f32.mrf.mxu0
      %v1150 = vadd.f32 %v1079, %v1149
      %1151 = vmatmul.bf16.gmra.mxu0 %v1077
      %v1152 = vpop.f32.mrf.mxu0
      %v1153 = vadd.f32 %v1079, %v1152
      %v1154 = vpop.f32.mrf.mxu0
      %v1155 = vadd.f32 %v1079, %v1154
      %1156 = vdwg.mxu0
      %v1157 = vmax.f32 %v1138, 0.0
      %v1158 = vmax.f32 %v1140, 0.0
      %v1159 = vmax.f32 %v1143, 0.0
      %v1160 = vmax.f32 %v1145, 0.0
      %v1161 = vmax.f32 %v1148, 0.0
      %v1162 = vmax.f32 %v1150, 0.0
      %v1163 = vmax.f32 %v1153, 0.0
      %v1164 = vmax.f32 %v1155, 0.0
      %v1165 = vadd.f32 %v1157, %v876
      %v1166 = vadd.f32 %v1158, %v878
      %v1167 = vadd.f32 %v1165, %v553
      %v1168 = vadd.f32 %v1166, %v555
      %v1169 = vmax.f32 %v1167, 0.0
      %v1170 = vmax.f32 %v1168, 0.0
      %1171 = vst [vmem:[%s359] sm:$0xff] %v1169
      %1172 = vst [vmem:[%s359 + $0x8] sm:$0xff] %v1170
      %v1173 = vadd.f32 %v1159, %v895
      %v1174 = vadd.f32 %v1160, %v897
      %v1175 = vadd.f32 %v1173, %v553
      %v1176 = vadd.f32 %v1174, %v555
      %v1177 = vmax.f32 %v1175, 0.0
      %v1178 = vmax.f32 %v1176, 0.0
      %s1179 = scalar_lea.vmem %s359, 16
      %1180 = vst [vmem:[%s1179] sm:$0xff] %v1177
      %1181 = vst [vmem:[%s1179 + $0x8] sm:$0xff] %v1178
      %v1182 = vadd.f32 %v1161, %v881
      %v1183 = vadd.f32 %v1162, %v883
      %v1184 = vadd.f32 %v1182, %v553
      %v1185 = vadd.f32 %v1183, %v555
      %v1186 = vmax.f32 %v1184, 0.0
      %v1187 = vmax.f32 %v1185, 0.0
      %s1188 = scalar_lea.vmem %s359, 32
      %1189 = vst [vmem:[%s1188] sm:$0xff] %v1186
      %1190 = vst [vmem:[%s1188 + $0x8] sm:$0xff] %v1187
      %v1191 = vadd.f32 %v1163, %v900
      %v1192 = vadd.f32 %v1164, %v902
      %v1193 = vadd.f32 %v1191, %v553
      %v1194 = vadd.f32 %v1192, %v555
      %v1195 = vmax.f32 %v1193, 0.0
      %v1196 = vmax.f32 %v1194, 0.0
      %s1197 = scalar_lea.vmem %s359, 48
      %1198 = vst [vmem:[%s1197] sm:$0xff] %v1195
      %1199 = vst [vmem:[%s1197 + $0x8] sm:$0xff] %v1196
      %p1200 = scmp.lt.s32.totalorder %s21, 1
      %s1201 = scalar_select %p1200, %s21, 1
      %s1202 = smul.addr %s1201, 8
      %s1203 = smul.addr %s1202, 8
      %s1204 = scalar_lea.vmem %s10, %s1203
      // Predicated region
      $region61: #{pyramid_upsample.1} parent=59 // pred_check
        %p1205 = pneg %p254
      $region62: #{pyramid_upsample.1} parent=59 // pred_check_branch
        %1207 = sbr.rel (%p1205) target = $region64
      $region63: #{pyramid_upsample.1} parent=59 // pred_region
        _
      $region64: #{pyramid_upsample.1} parent=59 // pred_fallthru
        _
    $region60: #{pyramid_upsample.1} parent=5 // pred_fallthru
      _
    %p1208 = scmp.le.s32.totalorder 2, %s16
    // Predicated region
    $region65: #{pyramid_upsample.1} parent=5 // pred_check
      %p1209 = pneg %p1208
    $region66: #{pyramid_upsample.1} parent=5 // pred_check_branch
      %1211 = sbr.rel (%p1209) target = $region68
    $region67: #{pyramid_upsample.1} parent=5 // pred_region
      %s1212 = ssub.s32 %s16, 2
      // Predicated region
      $region69: #{pyramid_upsample.1} parent=67 // pred_check
        %p1213 = pneg %p260
      $region70: #{pyramid_upsample.1} parent=67 // pred_check_branch
        %1215 = sbr.rel (%p1213) target = $region72
      $region71: #{pyramid_upsample.1} parent=67 // pred_region
        %p1216 = scmp.lt.s32.totalorder %s22, 1
        %s1217 = scalar_select %p1216, %s22, 1
        %s1218 = smul.addr %s1217, 8
        %s1219 = smul.addr %s1218, 8
        %s1220 = scalar_lea.vmem %s10, %s1219
      $region72: #{pyramid_upsample.1} parent=67 // pred_fallthru
        _
    $region68: #{pyramid_upsample.1} parent=5 // pred_fallthru
      _
  $region6: #{pyramid_upsample.1} parent=0 // loop_footer
    %s20 = sadd.s32 1, %s16
  $region7: #{pyramid_upsample.1} parent=0 // loop_footer_branch
    %15 = sbr.rel target = $region3
  $region8: #{pyramid_upsample.1} parent=0 // loop_exit
    _

</llo_original>
